<compile_context>
chip_gen: v5e
topology: v5e:2x2
jax: 0.10.0
libtpu: 0.0.40
codegen_flags: <defaults>
</compile_context>

<pallas_src>
import functools

import numpy as np
import jax
import jax.numpy as jnp
from jax.experimental import pallas as pl
from jax.experimental.pallas import tpu as pltpu

OUT_PAD = 8  # pad graph-output dim (6 or 7) to a full sublane group


# ----------------------------------------------------------------------------
# Static-config helpers (glue, no torch).
# ----------------------------------------------------------------------------
def create_uniform_3d_grid(n_points: int):
    """Uniform grid in [-1, 1]^3, shape (1, P, P, P, 3), last dim = (x, y, z)."""
    lin = np.linspace(-1.0, 1.0, n_points, dtype=np.float32)
    zz, yy, xx = np.meshgrid(lin, lin, lin, indexing="ij")  # over (D, H, W)
    grid = np.stack([xx, yy, zz], axis=-1)                  # (P, P, P, 3)
    return grid[None], n_points ** 3


def get_initial_edges(n_points: int) -> np.ndarray:
    """Graph edges, effectively an adjacency matrix: ones / n_points."""
    return np.ones((1, n_points, n_points), dtype=np.float32) / n_points


def build_sampling_matrix(grid_xyz: np.ndarray, spatial) -> np.ndarray:
    """Trilinear grid_sample (align_corners=True) as a constant (N, D*H*W) matrix."""
    D, H, W = spatial
    N = grid_xyz.shape[0]
    sizes = np.array([W, H, D], dtype=np.float64)           # x->W, y->H, z->D
    pix = (grid_xyz.astype(np.float64) + 1.0) * 0.5 * (sizes - 1.0)
    x, y, z = pix[:, 0], pix[:, 1], pix[:, 2]
    x0 = np.clip(np.floor(x), 0, W - 2).astype(np.int64)
    y0 = np.clip(np.floor(y), 0, H - 2).astype(np.int64)
    z0 = np.clip(np.floor(z), 0, D - 2).astype(np.int64)
    fx, fy, fz = x - x0, y - y0, z - z0
    mat = np.zeros((N, D * H * W), dtype=np.float32)
    rows = np.arange(N)
    for dz in (0, 1):
        wz = fz if dz else (1.0 - fz)
        for dy in (0, 1):
            wy = fy if dy else (1.0 - fy)
            for dx in (0, 1):
                wx = fx if dx else (1.0 - fx)
                idx = (z0 + dz) * H * W + (y0 + dy) * W + (x0 + dx)
                np.add.at(mat, (rows, idx), (wz * wy * wx).astype(np.float32))
    return mat


# ----------------------------------------------------------------------------
# Fused Pallas kernel (transposed orientation, one grid step, batch unrolled).
# ----------------------------------------------------------------------------
def _fused_kernel(fm_ref, ewT_ref, eT_ref, w1_ref, b1_ref, w2_ref, b2_ref,
                  w3_ref, b3_ref, m_ref, pts_ref, gout_ref, shape_ref,
                  *, batch, has_scale):
    cd = ewT_ref.dtype  # compute dtype for MXU operands (f32 accumulation)

    # Batch-invariant operands: loaded once, reused by every chain.
    ewT = ewT_ref[...]          # (V, N)   = (edges @ w_samp)^T
    eT = eT_ref[...]            # (N, N)   = edges^T
    w1t, b1 = w1_ref[...], b1_ref[...]    # (H, C), (H, 1)
    w2t, b2 = w2_ref[...], b2_ref[...]    # (H, H), (H, 1)
    w3t, b3 = w3_ref[...], b3_ref[...]    # (OUT_PAD, H), (OUT_PAD, 1)
    m_row = m_ref[...]          # (1, N)   = ones(1,N)/N @ edges  (node-mean fold)
    pts = pts_ref[...]          # (3, P)   template^T, rows x / y / z
    tx0 = pts[0:1, :]
    ty0 = pts[1:2, :]
    tz0 = pts[2:3, :]

    # B is small & static: unrolled Python loop -> independent chains the LLO
    # scheduler can interleave, and zero per-batch grid-step overhead.
    for b in range(batch):
        fm_b = fm_ref[b]                                                # (C, V)
        # sampling + layer-1 aggregation folded: s = (edges @ w_samp @ fm^T)^T
        s = jnp.dot(fm_b, ewT, preferred_element_type=jnp.float32)      # (C, N)
        # GCN layer 1 (transposed): h1^T = relu(w1^T @ s + b1)
        h = jnp.maximum(
            jnp.dot(w1t, s.astype(cd), preferred_element_type=jnp.float32) + b1, 0.0)
        # GCN layer 2: aggregate, linear, relu
        h = jnp.dot(h.astype(cd), eT, preferred_element_type=jnp.float32)      # (H, N)
        h = jnp.maximum(
            jnp.dot(w2t, h.astype(cd), preferred_element_type=jnp.float32) + b2, 0.0)
        # Output GCN layer + mean-over-nodes, folded:
        #   g^T = sum_n m[n] * (w3^T @ h2^T)[:, n] + b3^T
        g_full = jnp.dot(w3t, h.astype(cd), preferred_element_type=jnp.float32)  # (OUT_PAD, N)
        gT = jnp.sum(g_full * m_row, axis=1, keepdims=True) + b3                 # (OUT_PAD, 1)
        gout_ref[b] = gT

        # ---- affine parameters: static sublane slices (no iota/where picks) ----
        # layout: [tx, ty, tz, rx, ry, rz, (log_scale)]
        tx, ty, tz = gT[0:1, 0:1], gT[1:2, 0:1], gT[2:3, 0:1]
        rx, ry, rz = gT[3:4, 0:1], gT[4:5, 0:1], gT[5:6, 0:1]
        if has_scale:
            sc = jnp.exp(gT[6:7, 0:1])
        else:
            sc = jnp.ones_like(tx)
        cx, sx = jnp.cos(rx), jnp.sin(rx)
        cy, sy = jnp.cos(ry), jnp.sin(ry)
        cz, sz = jnp.cos(rz), jnp.sin(rz)

        # ---- apply s * (Rz @ Ry @ Rx) + t to the template, lane-dense rows ----
        # Rx
        y1 = cx * ty0 - sx * tz0
        z1 = sx * ty0 + cx * tz0
        # Ry
        x2 = cy * tx0 + sy * z1
        z2 = -sy * tx0 + cy * z1
        # Rz
        x3 = cz * x2 - sz * y1
        y3 = sz * x2 + cz * y1

        shape_ref[b, 0:1, :] = sc * x3 + tx
        shape_ref[b, 1:2, :] = sc * y3 + ty
        shape_ref[b, 2:3, :] = sc * z2 + tz


def fused_global_graph(w_samp, fm_cv, edges, gcn_params, pts_t,
                       compute_dtype=jnp.bfloat16):
    """Sampling + GCN block + affine transform in one single-step pallas_call.

    Args:
      w_samp:   (N, V)     constant trilinear sampling matrix.
      fm_cv:    (B, C, V)  channels-on-sublanes flattened feature maps.
      edges:    (1, N, N)  learnable adjacency (shared across batch).
      gcn_params: dict with w1 (C,H), b1 (1,H), w2 (H,H), b2 (1,H),
                  w3 (H,out_dim), b3 (1,out_dim).
      pts_t:    (3, P)     transposed shape template (shared across batch).
      compute_dtype: MXU operand dtype (bf16 recommended on v6e/v7x);
                  accumulation stays f32 via preferred_element_type.
    Returns:
      graph_output (B, out_dim), shape_batch (B, P, 3).
    """
    B, C, V = fm_cv.shape
    N = w_samp.shape[0]
    Hd = gcn_params["w1"].shape[1]
    out_dim = gcn_params["w3"].shape[1]
    P = pts_t.shape[1]
    cd = compute_dtype

    e = edges[0]
    # Batch-invariant folds, computed once per forward (not per batch element).
    ewT = jnp.transpose(e @ w_samp).astype(cd)                   # (V, N)
    eT = jnp.transpose(e).astype(cd)                             # (N, N)
    m_row = jnp.mean(e, axis=0, keepdims=True)                   # (1, N), f32
    w1t = jnp.transpose(gcn_params["w1"]).astype(cd)             # (Hd, C)
    w2t = jnp.transpose(gcn_params["w2"]).astype(cd)             # (Hd, Hd)
    b1c = jnp.transpose(gcn_params["b1"]).astype(jnp.float32)    # (Hd, 1)
    b2c = jnp.transpose(gcn_params["b2"]).astype(jnp.float32)    # (Hd, 1)
    # Output head padded to a full sublane group (8).
    w3t = jnp.zeros((OUT_PAD, Hd), cd).at[:out_dim, :].set(
        jnp.transpose(gcn_params["w3"]).astype(cd))
    b3c = jnp.zeros((OUT_PAD, 1), jnp.float32).at[:out_dim, 0].set(
        gcn_params["b3"][0])
    fm = fm_cv.astype(cd)
    pts = pts_t.astype(jnp.float32)

    # TODO(synk): at realistic V, K-tile ewT / fm over V (trailing "arbitrary"
    # grid axis + f32 accumulator) or switch to an 8-corner gather; also
    # single-buffer the constant operands (pl.Buffered(1)) once multi-step.
    gout, shape_t = pl.pallas_call(
        functools.partial(_fused_kernel, batch=B, has_scale=(out_dim >= 7)),
        out_shape=(jax.ShapeDtypeStruct((B, OUT_PAD, 1), jnp.float32),
                   jax.ShapeDtypeStruct((B, 3, P), jnp.float32)),
        grid=(1,),
        in_specs=[
            pl.BlockSpec((B, C, V), lambda i: (0, 0, 0)),      # feature maps
            pl.BlockSpec((V, N), lambda i: (0, 0)),            # (e @ w_samp)^T
            pl.BlockSpec((N, N), lambda i: (0, 0)),            # edges^T
            pl.BlockSpec((Hd, C), lambda i: (0, 0)),
            pl.BlockSpec((Hd, 1), lambda i: (0, 0)),
            pl.BlockSpec((Hd, Hd), lambda i: (0, 0)),
            pl.BlockSpec((Hd, 1), lambda i: (0, 0)),
            pl.BlockSpec((OUT_PAD, Hd), lambda i: (0, 0)),
            pl.BlockSpec((OUT_PAD, 1), lambda i: (0, 0)),
            pl.BlockSpec((1, N), lambda i: (0, 0)),            # node-mean row
            pl.BlockSpec((3, P), lambda i: (0, 0)),            # template^T
        ],
        out_specs=(pl.BlockSpec((B, OUT_PAD, 1), lambda i: (0, 0, 0)),
                   pl.BlockSpec((B, 3, P), lambda i: (0, 0, 0))),
        compiler_params=pltpu.CompilerParams(
            dimension_semantics=("arbitrary",)),
        # TODO(synk): on v7x, shard the batch across the 2 TensorCores
        # (pltpu.CORE_PARALLEL grid axis / pl.core_map) instead of one step.
    )(fm, ewT, eT, w1t, b1c, w2t, b2c, w3t, b3c, m_row, pts)

    graph_output = gout[:, :out_dim, 0]                          # (B, out_dim)
    shape_batch = jnp.transpose(shape_t, (0, 2, 1))               # (B, P, 3)
    return graph_output, shape_batch


# ----------------------------------------------------------------------------
# GlobalGraphLayer forward.
# ----------------------------------------------------------------------------
def global_graph_layer_forward(x, state, compute_dtype=jnp.bfloat16):
    cnn_prediction = x["cnn_prediction"]
    batch_size = cnn_prediction.shape[0]

    # detached_feature_map -> .detach(); a no-op for inference (stop_gradient).
    # NOTE: feature_list order follows dict insertion order; callers must pass
    # features in the channel order the GCN weights were trained with.
    feature_list = [v for k, v in x.items() if k.endswith(("_features", "_feature"))]
    feature_map = jnp.concatenate([cnn_prediction] + feature_list, axis=1)  # NCDHW

    B, C, D, H, W = feature_map.shape
    # Channels on sublanes, voxels on lanes: a plain reshape, no transpose.
    fm_cv = feature_map.reshape(B, C, D * H * W)                 # (B, C, V)

    pts_t = jnp.transpose(state["shape_template"][0], (1, 0))    # (3, P)

    graph_output, shape_batch = fused_global_graph(
        state["w_samp"], fm_cv, state["edges"], state["gcn_params"], pts_t,
        compute_dtype=compute_dtype)
    assert graph_output.ndim == 2

    # transform_params (matches get_affine_matrix's auxiliary outputs).
    out_dim = graph_output.shape[1]
    t = graph_output[:, 0:3]
    ang = graph_output[:, 3:6]
    if out_dim >= 7:
        s = jnp.exp(graph_output[:, 6])
    else:
        s = jnp.ones((batch_size,), jnp.float32)
    transform_params = {"translation": t, "rotation": ang, "scale": s}

    return {**x,
            "gcn_prediction_global": shape_batch,
            "transform_params": transform_params,
            "graph_output": graph_output}


# ----------------------------------------------------------------------------
# Main.
# ----------------------------------------------------------------------------
if __name__ == "__main__":
    # Small shapes consistent with the module.
    B = 2
    C_CNN, C_EXTRA = 4, 4
    D = H = W = 8
    POINTS_PER_DIM = 4           # -> 64 graph nodes
    HIDDEN = 32
    OUT_DIM_GRAPH = 7
    N_TEMPLATE = 128

    key = jax.random.PRNGKey(0)
    k_cnn, k_feat, k_tmpl, k1, k2, k3, kb1, kb2 = jax.random.split(key, 8)

    # Inputs (PyTorch NCDHW layout).
    x = {
        "cnn_prediction": jax.random.normal(k_cnn, (B, C_CNN, D, H, W), jnp.float32),
        "encoder_features": jax.random.normal(k_feat, (B, C_EXTRA, D, H, W), jnp.float32),
    }
    C_TOTAL = C_CNN + C_EXTRA

    # Buffers / parameters (deterministic, synthetic).
    sample_grid, n_points = create_uniform_3d_grid(POINTS_PER_DIM)     # (1,P,P,P,3)
    grid_xyz = sample_grid.reshape(-1, 3)                              # (N,3)
    w_samp = jnp.asarray(build_sampling_matrix(grid_xyz, (D, H, W)))   # (N, D*H*W)
    edges = jnp.asarray(get_initial_edges(n_points))                   # (1,N,N)
    shape_template = 0.5 * jax.random.normal(k_tmpl, (1, N_TEMPLATE, 3), jnp.float32)

    gcn_params = {
        "w1": 0.1 * jax.random.normal(k1, (C_TOTAL, HIDDEN), jnp.float32),
        "b1": 0.01 * jax.random.normal(kb1, (1, HIDDEN), jnp.float32),
        "w2": 0.1 * jax.random.normal(k2, (HIDDEN, HIDDEN), jnp.float32),
        "b2": 0.01 * jax.random.normal(kb2, (1, HIDDEN), jnp.float32),
        "w3": 0.1 * jax.random.normal(k3, (HIDDEN, OUT_DIM_GRAPH), jnp.float32),
        "b3": jnp.zeros((1, OUT_DIM_GRAPH), jnp.float32),
    }

    state = {
        "w_samp": w_samp,
        "edges": edges,
        "shape_template": shape_template,
        "gcn_params": gcn_params,
    }

    result = global_graph_layer_forward(x, state)
    jax.block_until_ready(result["gcn_prediction_global"])
    jax.block_until_ready(result["graph_output"])

    assert result["gcn_prediction_global"].shape == (B, N_TEMPLATE, 3)
    assert result["graph_output"].shape == (B, OUT_DIM_GRAPH)
    assert result["transform_params"]["scale"].shape == (B,)
    assert bool(jnp.isfinite(result["gcn_prediction_global"]).all())
    assert bool(jnp.isfinite(result["graph_output"]).all())
    print("KERNEL_OK")
</pallas_src>

<mosaic_0001>
module attributes {stable_mosaic.version = 11 : i64} {
  func.func @_fused_kernel(%arg0: i32, %arg1: memref<2x8x512xbf16, #tpu.memory_space<vmem>>, %arg2: memref<512x64xbf16, #tpu.memory_space<vmem>>, %arg3: memref<64x64xbf16, #tpu.memory_space<vmem>>, %arg4: memref<32x8xbf16, #tpu.memory_space<vmem>>, %arg5: memref<32x1xf32, #tpu.memory_space<vmem>>, %arg6: memref<32x32xbf16, #tpu.memory_space<vmem>>, %arg7: memref<32x1xf32, #tpu.memory_space<vmem>>, %arg8: memref<8x32xbf16, #tpu.memory_space<vmem>>, %arg9: memref<8x1xf32, #tpu.memory_space<vmem>>, %arg10: memref<1x64xf32, #tpu.memory_space<vmem>>, %arg11: memref<3x128xf32, #tpu.memory_space<vmem>>, %arg12: memref<2x8x1xf32, #tpu.memory_space<vmem>>, %arg13: memref<2x3x128xf32, #tpu.memory_space<vmem>>) attributes {dimension_semantics = [#tpu.dimension_semantics<arbitrary>], iteration_bounds = array<i64: 1>, scalar_prefetch = 0 : i64, scratch_operands = 0 : i64, tpu.core_type = #tpu.core_type<tc>, window_params = [{pipeline_mode = #tpu.pipeline_mode<synchronous>, transform_indices = @transform_0, window_bounds = array<i64: 2, 8, 512>}, {pipeline_mode = #tpu.pipeline_mode<synchronous>, transform_indices = @transform_1, window_bounds = array<i64: 512, 64>}, {pipeline_mode = #tpu.pipeline_mode<synchronous>, transform_indices = @transform_2, window_bounds = array<i64: 64, 64>}, {pipeline_mode = #tpu.pipeline_mode<synchronous>, transform_indices = @transform_3, window_bounds = array<i64: 32, 8>}, {pipeline_mode = #tpu.pipeline_mode<synchronous>, transform_indices = @transform_4, window_bounds = array<i64: 32, 1>}, {pipeline_mode = #tpu.pipeline_mode<synchronous>, transform_indices = @transform_5, window_bounds = array<i64: 32, 32>}, {pipeline_mode = #tpu.pipeline_mode<synchronous>, transform_indices = @transform_6, window_bounds = array<i64: 32, 1>}, {pipeline_mode = #tpu.pipeline_mode<synchronous>, transform_indices = @transform_7, window_bounds = array<i64: 8, 32>}, {pipeline_mode = #tpu.pipeline_mode<synchronous>, transform_indices = @transform_8, window_bounds = array<i64: 8, 1>}, {pipeline_mode = #tpu.pipeline_mode<synchronous>, transform_indices = @transform_9, window_bounds = array<i64: 1, 64>}, {pipeline_mode = #tpu.pipeline_mode<synchronous>, transform_indices = @transform_10, window_bounds = array<i64: 3, 128>}, {pipeline_mode = #tpu.pipeline_mode<synchronous>, transform_indices = @transform_11, window_bounds = array<i64: 2, 8, 1>}, {pipeline_mode = #tpu.pipeline_mode<synchronous>, transform_indices = @transform_12, window_bounds = array<i64: 2, 3, 128>}]} {
    %c0 = arith.constant 0 : index
    %c0_0 = arith.constant 0 : index
    %0 = vector.load %arg2[%c0, %c0_0] : memref<512x64xbf16, #tpu.memory_space<vmem>>, vector<512x64xbf16>
    %c0_1 = arith.constant 0 : index
    %c0_2 = arith.constant 0 : index
    %1 = vector.load %arg3[%c0_1, %c0_2] : memref<64x64xbf16, #tpu.memory_space<vmem>>, vector<64x64xbf16>
    %c0_3 = arith.constant 0 : index
    %c0_4 = arith.constant 0 : index
    %2 = vector.load %arg4[%c0_3, %c0_4] : memref<32x8xbf16, #tpu.memory_space<vmem>>, vector<32x8xbf16>
    %c0_5 = arith.constant 0 : index
    %c0_6 = arith.constant 0 : index
    %3 = vector.load %arg5[%c0_5, %c0_6] : memref<32x1xf32, #tpu.memory_space<vmem>>, vector<32x1xf32>
    %c0_7 = arith.constant 0 : index
    %c0_8 = arith.constant 0 : index
    %4 = vector.load %arg6[%c0_7, %c0_8] : memref<32x32xbf16, #tpu.memory_space<vmem>>, vector<32x32xbf16>
    %c0_9 = arith.constant 0 : index
    %c0_10 = arith.constant 0 : index
    %5 = vector.load %arg7[%c0_9, %c0_10] : memref<32x1xf32, #tpu.memory_space<vmem>>, vector<32x1xf32>
    %c0_11 = arith.constant 0 : index
    %c0_12 = arith.constant 0 : index
    %6 = vector.load %arg8[%c0_11, %c0_12] : memref<8x32xbf16, #tpu.memory_space<vmem>>, vector<8x32xbf16>
    %c0_13 = arith.constant 0 : index
    %c0_14 = arith.constant 0 : index
    %7 = vector.load %arg9[%c0_13, %c0_14] : memref<8x1xf32, #tpu.memory_space<vmem>>, vector<8x1xf32>
    %c0_15 = arith.constant 0 : index
    %c0_16 = arith.constant 0 : index
    %8 = vector.load %arg10[%c0_15, %c0_16] : memref<1x64xf32, #tpu.memory_space<vmem>>, vector<1x64xf32>
    %c0_17 = arith.constant 0 : index
    %c0_18 = arith.constant 0 : index
    %9 = vector.load %arg11[%c0_17, %c0_18] : memref<3x128xf32, #tpu.memory_space<vmem>>, vector<3x128xf32>
    %10 = vector.extract_strided_slice %9 {offsets = [0, 0], sizes = [1, 128], strides = [1, 1]} : vector<3x128xf32> to vector<1x128xf32>
    %11 = vector.extract_strided_slice %9 {offsets = [1, 0], sizes = [1, 128], strides = [1, 1]} : vector<3x128xf32> to vector<1x128xf32>
    %12 = vector.extract_strided_slice %9 {offsets = [2, 0], sizes = [1, 128], strides = [1, 1]} : vector<3x128xf32> to vector<1x128xf32>
    %c0_19 = arith.constant 0 : index
    %c0_20 = arith.constant 0 : index
    %c0_21 = arith.constant 0 : index
    %13 = vector.load %arg1[%c0_19, %c0_20, %c0_21] : memref<2x8x512xbf16, #tpu.memory_space<vmem>>, vector<1x8x512xbf16>
    %14 = vector.shape_cast %13 : vector<1x8x512xbf16> to vector<8x512xbf16>
    %cst = arith.constant dense<0.000000e+00> : vector<8x64xf32>
    %15 = tpu.matmul %14, %0, %cst {dimension_numbers = #tpu.dot_dimension_numbers<[1], [0], [0], [1], [0, 0, 1, 1], [], []>} : vector<8x512xbf16>, vector<512x64xbf16>, vector<8x64xf32> -> vector<8x64xf32>
    %16 = arith.truncf %15 : vector<8x64xf32> to vector<8x64xbf16>
    %cst_22 = arith.constant dense<0.000000e+00> : vector<32x64xf32>
    %17 = tpu.matmul %2, %16, %cst_22 {dimension_numbers = #tpu.dot_dimension_numbers<[1], [0], [0], [1], [0, 0, 1, 1], [], []>} : vector<32x8xbf16>, vector<8x64xbf16>, vector<32x64xf32> -> vector<32x64xf32>
    %18 = vector.broadcast %3 : vector<32x1xf32> to vector<32x64xf32>
    %19 = arith.addf %17, %18 : vector<32x64xf32>
    %cst_23 = arith.constant 0.000000e+00 : f32
    %20 = vector.broadcast %cst_23 : f32 to vector<32x64xf32>
    %21 = arith.maximumf %19, %20 : vector<32x64xf32>
    %22 = arith.truncf %21 : vector<32x64xf32> to vector<32x64xbf16>
    %cst_24 = arith.constant dense<0.000000e+00> : vector<32x64xf32>
    %23 = tpu.matmul %22, %1, %cst_24 {dimension_numbers = #tpu.dot_dimension_numbers<[1], [0], [0], [1], [0, 0, 1, 1], [], []>} : vector<32x64xbf16>, vector<64x64xbf16>, vector<32x64xf32> -> vector<32x64xf32>
    %24 = arith.truncf %23 : vector<32x64xf32> to vector<32x64xbf16>
    %cst_25 = arith.constant dense<0.000000e+00> : vector<32x64xf32>
    %25 = tpu.matmul %4, %24, %cst_25 {dimension_numbers = #tpu.dot_dimension_numbers<[1], [0], [0], [1], [0, 0, 1, 1], [], []>} : vector<32x32xbf16>, vector<32x64xbf16>, vector<32x64xf32> -> vector<32x64xf32>
    %26 = vector.broadcast %5 : vector<32x1xf32> to vector<32x64xf32>
    %27 = arith.addf %25, %26 : vector<32x64xf32>
    %cst_26 = arith.constant 0.000000e+00 : f32
    %28 = vector.broadcast %cst_26 : f32 to vector<32x64xf32>
    %29 = arith.maximumf %27, %28 : vector<32x64xf32>
    %30 = arith.truncf %29 : vector<32x64xf32> to vector<32x64xbf16>
    %cst_27 = arith.constant dense<0.000000e+00> : vector<8x64xf32>
    %31 = tpu.matmul %6, %30, %cst_27 {dimension_numbers = #tpu.dot_dimension_numbers<[1], [0], [0], [1], [0, 0, 1, 1], [], []>} : vector<8x32xbf16>, vector<32x64xbf16>, vector<8x64xf32> -> vector<8x64xf32>
    %32 = vector.broadcast %8 : vector<1x64xf32> to vector<8x64xf32>
    %33 = arith.mulf %31, %32 : vector<8x64xf32>
    %cst_28 = arith.constant dense<0.000000e+00> : vector<8xf32>
    %34 = vector.multi_reduction <add>, %33, %cst_28 [1] : vector<8x64xf32> to vector<8xf32>
    %35 = vector.shape_cast %34 : vector<8xf32> to vector<8x1xf32>
    %36 = arith.addf %35, %7 : vector<8x1xf32>
    %c0_29 = arith.constant 0 : index
    %c0_30 = arith.constant 0 : index
    %c0_31 = arith.constant 0 : index
    %37 = vector.load %arg12[%c0_29, %c0_30, %c0_31] : memref<2x8x1xf32, #tpu.memory_space<vmem>>, vector<1x8x1xf32>
    %38 = vector.shape_cast %37 : vector<1x8x1xf32> to vector<8x1xf32>
    %39 = vector.shape_cast %36 : vector<8x1xf32> to vector<1x8x1xf32>
    tpu.vector_store %arg12[%c0_29, %c0_30, %c0_31], %39 {strides = array<i32>} : memref<2x8x1xf32, #tpu.memory_space<vmem>>, vector<1x8x1xf32>,
    %40 = vector.extract_strided_slice %36 {offsets = [0, 0], sizes = [1, 1], strides = [1, 1]} : vector<8x1xf32> to vector<1x1xf32>
    %41 = vector.extract_strided_slice %36 {offsets = [1, 0], sizes = [1, 1], strides = [1, 1]} : vector<8x1xf32> to vector<1x1xf32>
    %42 = vector.extract_strided_slice %36 {offsets = [2, 0], sizes = [1, 1], strides = [1, 1]} : vector<8x1xf32> to vector<1x1xf32>
    %43 = vector.extract_strided_slice %36 {offsets = [3, 0], sizes = [1, 1], strides = [1, 1]} : vector<8x1xf32> to vector<1x1xf32>
    %44 = vector.extract_strided_slice %36 {offsets = [4, 0], sizes = [1, 1], strides = [1, 1]} : vector<8x1xf32> to vector<1x1xf32>
    %45 = vector.extract_strided_slice %36 {offsets = [5, 0], sizes = [1, 1], strides = [1, 1]} : vector<8x1xf32> to vector<1x1xf32>
    %46 = vector.extract_strided_slice %36 {offsets = [6, 0], sizes = [1, 1], strides = [1, 1]} : vector<8x1xf32> to vector<1x1xf32>
    %47 = math.exp %46 : vector<1x1xf32>
    %48 = math.cos %43 : vector<1x1xf32>
    %49 = math.sin %43 : vector<1x1xf32>
    %50 = math.cos %44 : vector<1x1xf32>
    %51 = math.sin %44 : vector<1x1xf32>
    %52 = math.cos %45 : vector<1x1xf32>
    %53 = math.sin %45 : vector<1x1xf32>
    %54 = vector.broadcast %48 : vector<1x1xf32> to vector<1x128xf32>
    %55 = arith.mulf %54, %11 : vector<1x128xf32>
    %56 = vector.broadcast %49 : vector<1x1xf32> to vector<1x128xf32>
    %57 = arith.mulf %56, %12 : vector<1x128xf32>
    %58 = arith.subf %55, %57 : vector<1x128xf32>
    %59 = vector.broadcast %49 : vector<1x1xf32> to vector<1x128xf32>
    %60 = arith.mulf %59, %11 : vector<1x128xf32>
    %61 = vector.broadcast %48 : vector<1x1xf32> to vector<1x128xf32>
    %62 = arith.mulf %61, %12 : vector<1x128xf32>
    %63 = arith.addf %60, %62 : vector<1x128xf32>
    %64 = vector.broadcast %50 : vector<1x1xf32> to vector<1x128xf32>
    %65 = arith.mulf %64, %10 : vector<1x128xf32>
    %66 = vector.broadcast %51 : vector<1x1xf32> to vector<1x128xf32>
    %67 = arith.mulf %66, %63 : vector<1x128xf32>
    %68 = arith.addf %65, %67 : vector<1x128xf32>
    %cst_32 = arith.constant 0.000000e+00 : f32
    %69 = vector.broadcast %cst_32 : f32 to vector<1x1xf32>
    %70 = arith.subf %69, %51 : vector<1x1xf32>
    %71 = vector.broadcast %70 : vector<1x1xf32> to vector<1x128xf32>
    %72 = arith.mulf %71, %10 : vector<1x128xf32>
    %73 = vector.broadcast %50 : vector<1x1xf32> to vector<1x128xf32>
    %74 = arith.mulf %73, %63 : vector<1x128xf32>
    %75 = arith.addf %72, %74 : vector<1x128xf32>
    %76 = vector.broadcast %52 : vector<1x1xf32> to vector<1x128xf32>
    %77 = arith.mulf %76, %68 : vector<1x128xf32>
    %78 = vector.broadcast %53 : vector<1x1xf32> to vector<1x128xf32>
    %79 = arith.mulf %78, %58 : vector<1x128xf32>
    %80 = arith.subf %77, %79 : vector<1x128xf32>
    %81 = vector.broadcast %53 : vector<1x1xf32> to vector<1x128xf32>
    %82 = arith.mulf %81, %68 : vector<1x128xf32>
    %83 = vector.broadcast %52 : vector<1x1xf32> to vector<1x128xf32>
    %84 = arith.mulf %83, %58 : vector<1x128xf32>
    %85 = arith.addf %82, %84 : vector<1x128xf32>
    %86 = vector.broadcast %47 : vector<1x1xf32> to vector<1x128xf32>
    %87 = arith.mulf %86, %80 : vector<1x128xf32>
    %88 = vector.broadcast %40 : vector<1x1xf32> to vector<1x128xf32>
    %89 = arith.addf %87, %88 : vector<1x128xf32>
    %c0_33 = arith.constant 0 : index
    %c0_34 = arith.constant 0 : index
    %c0_35 = arith.constant 0 : index
    %90 = vector.load %arg13[%c0_33, %c0_34, %c0_35] : memref<2x3x128xf32, #tpu.memory_space<vmem>>, vector<1x1x128xf32>
    %91 = vector.shape_cast %90 : vector<1x1x128xf32> to vector<1x128xf32>
    %92 = vector.shape_cast %89 : vector<1x128xf32> to vector<1x1x128xf32>
    tpu.vector_store %arg13[%c0_33, %c0_34, %c0_35], %92 {strides = array<i32>} : memref<2x3x128xf32, #tpu.memory_space<vmem>>, vector<1x1x128xf32>,
    %93 = vector.broadcast %47 : vector<1x1xf32> to vector<1x128xf32>
    %94 = arith.mulf %93, %85 : vector<1x128xf32>
    %95 = vector.broadcast %41 : vector<1x1xf32> to vector<1x128xf32>
    %96 = arith.addf %94, %95 : vector<1x128xf32>
    %c0_36 = arith.constant 0 : index
    %c1 = arith.constant 1 : index
    %c0_37 = arith.constant 0 : index
    %97 = vector.load %arg13[%c0_36, %c1, %c0_37] : memref<2x3x128xf32, #tpu.memory_space<vmem>>, vector<1x1x128xf32>
    %98 = vector.shape_cast %97 : vector<1x1x128xf32> to vector<1x128xf32>
    %99 = vector.shape_cast %96 : vector<1x128xf32> to vector<1x1x128xf32>
    tpu.vector_store %arg13[%c0_36, %c1, %c0_37], %99 {strides = array<i32>} : memref<2x3x128xf32, #tpu.memory_space<vmem>>, vector<1x1x128xf32>,
    %100 = vector.broadcast %47 : vector<1x1xf32> to vector<1x128xf32>
    %101 = arith.mulf %100, %75 : vector<1x128xf32>
    %102 = vector.broadcast %42 : vector<1x1xf32> to vector<1x128xf32>
    %103 = arith.addf %101, %102 : vector<1x128xf32>
    %c0_38 = arith.constant 0 : index
    %c2 = arith.constant 2 : index
    %c0_39 = arith.constant 0 : index
    %104 = vector.load %arg13[%c0_38, %c2, %c0_39] : memref<2x3x128xf32, #tpu.memory_space<vmem>>, vector<1x1x128xf32>
    %105 = vector.shape_cast %104 : vector<1x1x128xf32> to vector<1x128xf32>
    %106 = vector.shape_cast %103 : vector<1x128xf32> to vector<1x1x128xf32>
    tpu.vector_store %arg13[%c0_38, %c2, %c0_39], %106 {strides = array<i32>} : memref<2x3x128xf32, #tpu.memory_space<vmem>>, vector<1x1x128xf32>,
    %c1_40 = arith.constant 1 : index
    %c0_41 = arith.constant 0 : index
    %c0_42 = arith.constant 0 : index
    %107 = vector.load %arg1[%c1_40, %c0_41, %c0_42] : memref<2x8x512xbf16, #tpu.memory_space<vmem>>, vector<1x8x512xbf16>
    %108 = vector.shape_cast %107 : vector<1x8x512xbf16> to vector<8x512xbf16>
    %cst_43 = arith.constant dense<0.000000e+00> : vector<8x64xf32>
    %109 = tpu.matmul %108, %0, %cst_43 {dimension_numbers = #tpu.dot_dimension_numbers<[1], [0], [0], [1], [0, 0, 1, 1], [], []>} : vector<8x512xbf16>, vector<512x64xbf16>, vector<8x64xf32> -> vector<8x64xf32>
    %110 = arith.truncf %109 : vector<8x64xf32> to vector<8x64xbf16>
    %cst_44 = arith.constant dense<0.000000e+00> : vector<32x64xf32>
    %111 = tpu.matmul %2, %110, %cst_44 {dimension_numbers = #tpu.dot_dimension_numbers<[1], [0], [0], [1], [0, 0, 1, 1], [], []>} : vector<32x8xbf16>, vector<8x64xbf16>, vector<32x64xf32> -> vector<32x64xf32>
    %112 = vector.broadcast %3 : vector<32x1xf32> to vector<32x64xf32>
    %113 = arith.addf %111, %112 : vector<32x64xf32>
    %cst_45 = arith.constant 0.000000e+00 : f32
    %114 = vector.broadcast %cst_45 : f32 to vector<32x64xf32>
    %115 = arith.maximumf %113, %114 : vector<32x64xf32>
    %116 = arith.truncf %115 : vector<32x64xf32> to vector<32x64xbf16>
    %cst_46 = arith.constant dense<0.000000e+00> : vector<32x64xf32>
    %117 = tpu.matmul %116, %1, %cst_46 {dimension_numbers = #tpu.dot_dimension_numbers<[1], [0], [0], [1], [0, 0, 1, 1], [], []>} : vector<32x64xbf16>, vector<64x64xbf16>, vector<32x64xf32> -> vector<32x64xf32>
    %118 = arith.truncf %117 : vector<32x64xf32> to vector<32x64xbf16>
    %cst_47 = arith.constant dense<0.000000e+00> : vector<32x64xf32>
    %119 = tpu.matmul %4, %118, %cst_47 {dimension_numbers = #tpu.dot_dimension_numbers<[1], [0], [0], [1], [0, 0, 1, 1], [], []>} : vector<32x32xbf16>, vector<32x64xbf16>, vector<32x64xf32> -> vector<32x64xf32>
    %120 = vector.broadcast %5 : vector<32x1xf32> to vector<32x64xf32>
    %121 = arith.addf %119, %120 : vector<32x64xf32>
    %cst_48 = arith.constant 0.000000e+00 : f32
    %122 = vector.broadcast %cst_48 : f32 to vector<32x64xf32>
    %123 = arith.maximumf %121, %122 : vector<32x64xf32>
    %124 = arith.truncf %123 : vector<32x64xf32> to vector<32x64xbf16>
    %cst_49 = arith.constant dense<0.000000e+00> : vector<8x64xf32>
    %125 = tpu.matmul %6, %124, %cst_49 {dimension_numbers = #tpu.dot_dimension_numbers<[1], [0], [0], [1], [0, 0, 1, 1], [], []>} : vector<8x32xbf16>, vector<32x64xbf16>, vector<8x64xf32> -> vector<8x64xf32>
    %126 = vector.broadcast %8 : vector<1x64xf32> to vector<8x64xf32>
    %127 = arith.mulf %125, %126 : vector<8x64xf32>
    %cst_50 = arith.constant dense<0.000000e+00> : vector<8xf32>
    %128 = vector.multi_reduction <add>, %127, %cst_50 [1] : vector<8x64xf32> to vector<8xf32>
    %129 = vector.shape_cast %128 : vector<8xf32> to vector<8x1xf32>
    %130 = arith.addf %129, %7 : vector<8x1xf32>
    %c1_51 = arith.constant 1 : index
    %c0_52 = arith.constant 0 : index
    %c0_53 = arith.constant 0 : index
    %131 = vector.load %arg12[%c1_51, %c0_52, %c0_53] : memref<2x8x1xf32, #tpu.memory_space<vmem>>, vector<1x8x1xf32>
    %132 = vector.shape_cast %131 : vector<1x8x1xf32> to vector<8x1xf32>
    %133 = vector.shape_cast %130 : vector<8x1xf32> to vector<1x8x1xf32>
    tpu.vector_store %arg12[%c1_51, %c0_52, %c0_53], %133 {strides = array<i32>} : memref<2x8x1xf32, #tpu.memory_space<vmem>>, vector<1x8x1xf32>,
    %134 = vector.extract_strided_slice %130 {offsets = [0, 0], sizes = [1, 1], strides = [1, 1]} : vector<8x1xf32> to vector<1x1xf32>
    %135 = vector.extract_strided_slice %130 {offsets = [1, 0], sizes = [1, 1], strides = [1, 1]} : vector<8x1xf32> to vector<1x1xf32>
    %136 = vector.extract_strided_slice %130 {offsets = [2, 0], sizes = [1, 1], strides = [1, 1]} : vector<8x1xf32> to vector<1x1xf32>
    %137 = vector.extract_strided_slice %130 {offsets = [3, 0], sizes = [1, 1], strides = [1, 1]} : vector<8x1xf32> to vector<1x1xf32>
    %138 = vector.extract_strided_slice %130 {offsets = [4, 0], sizes = [1, 1], strides = [1, 1]} : vector<8x1xf32> to vector<1x1xf32>
    %139 = vector.extract_strided_slice %130 {offsets = [5, 0], sizes = [1, 1], strides = [1, 1]} : vector<8x1xf32> to vector<1x1xf32>
    %140 = vector.extract_strided_slice %130 {offsets = [6, 0], sizes = [1, 1], strides = [1, 1]} : vector<8x1xf32> to vector<1x1xf32>
    %141 = math.exp %140 : vector<1x1xf32>
    %142 = math.cos %137 : vector<1x1xf32>
    %143 = math.sin %137 : vector<1x1xf32>
    %144 = math.cos %138 : vector<1x1xf32>
    %145 = math.sin %138 : vector<1x1xf32>
    %146 = math.cos %139 : vector<1x1xf32>
    %147 = math.sin %139 : vector<1x1xf32>
    %148 = vector.broadcast %142 : vector<1x1xf32> to vector<1x128xf32>
    %149 = arith.mulf %148, %11 : vector<1x128xf32>
    %150 = vector.broadcast %143 : vector<1x1xf32> to vector<1x128xf32>
    %151 = arith.mulf %150, %12 : vector<1x128xf32>
    %152 = arith.subf %149, %151 : vector<1x128xf32>
    %153 = vector.broadcast %143 : vector<1x1xf32> to vector<1x128xf32>
    %154 = arith.mulf %153, %11 : vector<1x128xf32>
    %155 = vector.broadcast %142 : vector<1x1xf32> to vector<1x128xf32>
    %156 = arith.mulf %155, %12 : vector<1x128xf32>
    %157 = arith.addf %154, %156 : vector<1x128xf32>
    %158 = vector.broadcast %144 : vector<1x1xf32> to vector<1x128xf32>
    %159 = arith.mulf %158, %10 : vector<1x128xf32>
    %160 = vector.broadcast %145 : vector<1x1xf32> to vector<1x128xf32>
    %161 = arith.mulf %160, %157 : vector<1x128xf32>
    %162 = arith.addf %159, %161 : vector<1x128xf32>
    %cst_54 = arith.constant 0.000000e+00 : f32
    %163 = vector.broadcast %cst_54 : f32 to vector<1x1xf32>
    %164 = arith.subf %163, %145 : vector<1x1xf32>
    %165 = vector.broadcast %164 : vector<1x1xf32> to vector<1x128xf32>
    %166 = arith.mulf %165, %10 : vector<1x128xf32>
    %167 = vector.broadcast %144 : vector<1x1xf32> to vector<1x128xf32>
    %168 = arith.mulf %167, %157 : vector<1x128xf32>
    %169 = arith.addf %166, %168 : vector<1x128xf32>
    %170 = vector.broadcast %146 : vector<1x1xf32> to vector<1x128xf32>
    %171 = arith.mulf %170, %162 : vector<1x128xf32>
    %172 = vector.broadcast %147 : vector<1x1xf32> to vector<1x128xf32>
    %173 = arith.mulf %172, %152 : vector<1x128xf32>
    %174 = arith.subf %171, %173 : vector<1x128xf32>
    %175 = vector.broadcast %147 : vector<1x1xf32> to vector<1x128xf32>
    %176 = arith.mulf %175, %162 : vector<1x128xf32>
    %177 = vector.broadcast %146 : vector<1x1xf32> to vector<1x128xf32>
    %178 = arith.mulf %177, %152 : vector<1x128xf32>
    %179 = arith.addf %176, %178 : vector<1x128xf32>
    %180 = vector.broadcast %141 : vector<1x1xf32> to vector<1x128xf32>
    %181 = arith.mulf %180, %174 : vector<1x128xf32>
    %182 = vector.broadcast %134 : vector<1x1xf32> to vector<1x128xf32>
    %183 = arith.addf %181, %182 : vector<1x128xf32>
    %c1_55 = arith.constant 1 : index
    %c0_56 = arith.constant 0 : index
    %c0_57 = arith.constant 0 : index
    %184 = vector.load %arg13[%c1_55, %c0_56, %c0_57] : memref<2x3x128xf32, #tpu.memory_space<vmem>>, vector<1x1x128xf32>
    %185 = vector.shape_cast %184 : vector<1x1x128xf32> to vector<1x128xf32>
    %186 = vector.shape_cast %183 : vector<1x128xf32> to vector<1x1x128xf32>
    tpu.vector_store %arg13[%c1_55, %c0_56, %c0_57], %186 {strides = array<i32>} : memref<2x3x128xf32, #tpu.memory_space<vmem>>, vector<1x1x128xf32>,
    %187 = vector.broadcast %141 : vector<1x1xf32> to vector<1x128xf32>
    %188 = arith.mulf %187, %179 : vector<1x128xf32>
    %189 = vector.broadcast %135 : vector<1x1xf32> to vector<1x128xf32>
    %190 = arith.addf %188, %189 : vector<1x128xf32>
    %c1_58 = arith.constant 1 : index
    %c1_59 = arith.constant 1 : index
    %c0_60 = arith.constant 0 : index
    %191 = vector.load %arg13[%c1_58, %c1_59, %c0_60] : memref<2x3x128xf32, #tpu.memory_space<vmem>>, vector<1x1x128xf32>
    %192 = vector.shape_cast %191 : vector<1x1x128xf32> to vector<1x128xf32>
    %193 = vector.shape_cast %190 : vector<1x128xf32> to vector<1x1x128xf32>
    tpu.vector_store %arg13[%c1_58, %c1_59, %c0_60], %193 {strides = array<i32>} : memref<2x3x128xf32, #tpu.memory_space<vmem>>, vector<1x1x128xf32>,
    %194 = vector.broadcast %141 : vector<1x1xf32> to vector<1x128xf32>
    %195 = arith.mulf %194, %169 : vector<1x128xf32>
    %196 = vector.broadcast %136 : vector<1x1xf32> to vector<1x128xf32>
    %197 = arith.addf %195, %196 : vector<1x128xf32>
    %c1_61 = arith.constant 1 : index
    %c2_62 = arith.constant 2 : index
    %c0_63 = arith.constant 0 : index
    %198 = vector.load %arg13[%c1_61, %c2_62, %c0_63] : memref<2x3x128xf32, #tpu.memory_space<vmem>>, vector<1x1x128xf32>
    %199 = vector.shape_cast %198 : vector<1x1x128xf32> to vector<1x128xf32>
    %200 = vector.shape_cast %197 : vector<1x128xf32> to vector<1x1x128xf32>
    tpu.vector_store %arg13[%c1_61, %c2_62, %c0_63], %200 {strides = array<i32>} : memref<2x3x128xf32, #tpu.memory_space<vmem>>, vector<1x1x128xf32>,
    return
  }
  func.func @transform_0(%arg0: i32) -> (i32, i32, i32) {
    %c0_i32 = arith.constant 0 : i32
    %c0_i32_0 = arith.constant 0 : i32
    %c0_i32_1 = arith.constant 0 : i32
    %c0_i32_2 = arith.constant 0 : i32
    return %c0_i32, %c0_i32_0, %c0_i32_1 : i32, i32, i32
  }
  func.func @transform_1(%arg0: i32) -> (i32, i32) {
    %c0_i32 = arith.constant 0 : i32
    %c0_i32_0 = arith.constant 0 : i32
    %c0_i32_1 = arith.constant 0 : i32
    return %c0_i32, %c0_i32_0 : i32, i32
  }
  func.func @transform_2(%arg0: i32) -> (i32, i32) {
    %c0_i32 = arith.constant 0 : i32
    %c0_i32_0 = arith.constant 0 : i32
    %c0_i32_1 = arith.constant 0 : i32
    return %c0_i32, %c0_i32_0 : i32, i32
  }
  func.func @transform_3(%arg0: i32) -> (i32, i32) {
    %c0_i32 = arith.constant 0 : i32
    %c0_i32_0 = arith.constant 0 : i32
    %c0_i32_1 = arith.constant 0 : i32
    return %c0_i32, %c0_i32_0 : i32, i32
  }
  func.func @transform_4(%arg0: i32) -> (i32, i32) {
    %c0_i32 = arith.constant 0 : i32
    %c0_i32_0 = arith.constant 0 : i32
    %c0_i32_1 = arith.constant 0 : i32
    return %c0_i32, %c0_i32_0 : i32, i32
  }
  func.func @transform_5(%arg0: i32) -> (i32, i32) {
    %c0_i32 = arith.constant 0 : i32
    %c0_i32_0 = arith.constant 0 : i32
    %c0_i32_1 = arith.constant 0 : i32
    return %c0_i32, %c0_i32_0 : i32, i32
  }
  func.func @transform_6(%arg0: i32) -> (i32, i32) {
    %c0_i32 = arith.constant 0 : i32
    %c0_i32_0 = arith.constant 0 : i32
    %c0_i32_1 = arith.constant 0 : i32
    return %c0_i32, %c0_i32_0 : i32, i32
  }
  func.func @transform_7(%arg0: i32) -> (i32, i32) {
    %c0_i32 = arith.constant 0 : i32
    %c0_i32_0 = arith.constant 0 : i32
    %c0_i32_1 = arith.constant 0 : i32
    return %c0_i32, %c0_i32_0 : i32, i32
  }
  func.func @transform_8(%arg0: i32) -> (i32, i32) {
    %c0_i32 = arith.constant 0 : i32
    %c0_i32_0 = arith.constant 0 : i32
    %c0_i32_1 = arith.constant 0 : i32
    return %c0_i32, %c0_i32_0 : i32, i32
  }
  func.func @transform_9(%arg0: i32) -> (i32, i32) {
    %c0_i32 = arith.constant 0 : i32
    %c0_i32_0 = arith.constant 0 : i32
    %c0_i32_1 = arith.constant 0 : i32
    return %c0_i32, %c0_i32_0 : i32, i32
  }
  func.func @transform_10(%arg0: i32) -> (i32, i32) {
    %c0_i32 = arith.constant 0 : i32
    %c0_i32_0 = arith.constant 0 : i32
    %c0_i32_1 = arith.constant 0 : i32
    return %c0_i32, %c0_i32_0 : i32, i32
  }
  func.func @transform_11(%arg0: i32) -> (i32, i32, i32) {
    %c0_i32 = arith.constant 0 : i32
    %c0_i32_0 = arith.constant 0 : i32
    %c0_i32_1 = arith.constant 0 : i32
    %c0_i32_2 = arith.constant 0 : i32
    return %c0_i32, %c0_i32_0, %c0_i32_1 : i32, i32, i32
  }
  func.func @transform_12(%arg0: i32) -> (i32, i32, i32) {
    %c0_i32 = arith.constant 0 : i32
    %c0_i32_0 = arith.constant 0 : i32
    %c0_i32_1 = arith.constant 0 : i32
    %c0_i32_2 = arith.constant 0 : i32
    return %c0_i32, %c0_i32_0, %c0_i32_1 : i32, i32, i32
  }
}

</mosaic_0001>

<llo_original>
// kernel: tpu_custom_call.1
$region0: #{tpu_custom_call.1}
  #allocation0 [shape = 'u32[]', space=smem, size = 0x4, offset = 0x4, fixed_abs, tag = 'smem constant byte address 0x4 - core index']
  #allocation1 [shape = 'u32[72,128]{1,0:T(1,128)}', space=vmem, size = 0x9000, scoped, tag = 'internal scratch']
  %s0 = inlined_call_operand.vmem [shape: bf16[2,8,512], index: 0, kind: input, shape index: {}]
  %s1 = inlined_call_operand.vmem [shape: bf16[512,64], index: 1, kind: input, shape index: {}]
  %s2 = inlined_call_operand.vmem [shape: bf16[64,64], index: 2, kind: input, shape index: {}]
  %s3 = inlined_call_operand.vmem [shape: bf16[32,8], index: 3, kind: input, shape index: {}]
  %s4 = inlined_call_operand.vmem [shape: f32[32,1], index: 4, kind: input, shape index: {}]
  %s5 = inlined_call_operand.vmem [shape: bf16[32,32], index: 5, kind: input, shape index: {}]
  %s6 = inlined_call_operand.vmem [shape: f32[32,1], index: 6, kind: input, shape index: {}]
  %s7 = inlined_call_operand.vmem [shape: bf16[8,32], index: 7, kind: input, shape index: {}]
  %s8 = inlined_call_operand.vmem [shape: f32[8,1], index: 8, kind: input, shape index: {}]
  %s9 = inlined_call_operand.vmem [shape: f32[1,64], index: 9, kind: input, shape index: {}]
  %s10 = inlined_call_operand.vmem [shape: f32[3,128], index: 10, kind: input, shape index: {}]
  %s11 = inlined_call_operand.vmem [shape: f32[2,8,1], index: 11, kind: output, shape index: {0}]
  %s12 = inlined_call_operand.vmem [shape: f32[2,3,128], index: 12, kind: output, shape index: {1}]
  %13 = xla_tuple %s11, %s12
  %s14 = sld [smem:[#allocation0]]
  $region62: #{tpu_custom_call.1} parent=0
    _
  %s16 = ssub.s32 1, %s14
  %s17 = scalar_select 0, %s16, %s14
  // Predicated region
  $region2: #{tpu_custom_call.1} parent=0 // pred_check
    _
  $region3: #{tpu_custom_call.1} parent=0 // pred_check_branch
    %19 = sbr.rel (0) target = $region5
  $region4: #{tpu_custom_call.1} parent=0 // pred_region
    _
  $region5: #{tpu_custom_call.1} parent=0 // pred_fallthru
    _
  // Predicated region
  $region6: #{tpu_custom_call.1} parent=0 // pred_check
    _
  $region7: #{tpu_custom_call.1} parent=0 // pred_check_branch
    %21 = sbr.rel (0) target = $region9
  $region8: #{tpu_custom_call.1} parent=0 // pred_region
    _
  $region9: #{tpu_custom_call.1} parent=0 // pred_fallthru
    _
  // Predicated region
  $region10: #{tpu_custom_call.1} parent=0 // pred_check
    _
  $region11: #{tpu_custom_call.1} parent=0 // pred_check_branch
    %23 = sbr.rel (0) target = $region13
  $region12: #{tpu_custom_call.1} parent=0 // pred_region
    _
  $region13: #{tpu_custom_call.1} parent=0 // pred_fallthru
    _
  // Predicated region
  $region14: #{tpu_custom_call.1} parent=0 // pred_check
    _
  $region15: #{tpu_custom_call.1} parent=0 // pred_check_branch
    %25 = sbr.rel (0) target = $region17
  $region16: #{tpu_custom_call.1} parent=0 // pred_region
    _
  $region17: #{tpu_custom_call.1} parent=0 // pred_fallthru
    _
  // Predicated region
  $region18: #{tpu_custom_call.1} parent=0 // pred_check
    _
  $region19: #{tpu_custom_call.1} parent=0 // pred_check_branch
    %27 = sbr.rel (0) target = $region21
  $region20: #{tpu_custom_call.1} parent=0 // pred_region
    _
  $region21: #{tpu_custom_call.1} parent=0 // pred_fallthru
    _
  // Predicated region
  $region22: #{tpu_custom_call.1} parent=0 // pred_check
    _
  $region23: #{tpu_custom_call.1} parent=0 // pred_check_branch
    %29 = sbr.rel (0) target = $region25
  $region24: #{tpu_custom_call.1} parent=0 // pred_region
    _
  $region25: #{tpu_custom_call.1} parent=0 // pred_fallthru
    _
  // Predicated region
  $region26: #{tpu_custom_call.1} parent=0 // pred_check
    _
  $region27: #{tpu_custom_call.1} parent=0 // pred_check_branch
    %31 = sbr.rel (0) target = $region29
  $region28: #{tpu_custom_call.1} parent=0 // pred_region
    _
  $region29: #{tpu_custom_call.1} parent=0 // pred_fallthru
    _
  // Predicated region
  $region30: #{tpu_custom_call.1} parent=0 // pred_check
    _
  $region31: #{tpu_custom_call.1} parent=0 // pred_check_branch
    %33 = sbr.rel (0) target = $region33
  $region32: #{tpu_custom_call.1} parent=0 // pred_region
    _
  $region33: #{tpu_custom_call.1} parent=0 // pred_fallthru
    _
  // Predicated region
  $region34: #{tpu_custom_call.1} parent=0 // pred_check
    _
  $region35: #{tpu_custom_call.1} parent=0 // pred_check_branch
    %35 = sbr.rel (0) target = $region37
  $region36: #{tpu_custom_call.1} parent=0 // pred_region
    _
  $region37: #{tpu_custom_call.1} parent=0 // pred_fallthru
    _
  // Predicated region
  $region38: #{tpu_custom_call.1} parent=0 // pred_check
    _
  $region39: #{tpu_custom_call.1} parent=0 // pred_check_branch
    %37 = sbr.rel (0) target = $region41
  $region40: #{tpu_custom_call.1} parent=0 // pred_region
    _
  $region41: #{tpu_custom_call.1} parent=0 // pred_fallthru
    _
  // Predicated region
  $region42: #{tpu_custom_call.1} parent=0 // pred_check
    _
  $region43: #{tpu_custom_call.1} parent=0 // pred_check_branch
    %39 = sbr.rel (0) target = $region45
  $region44: #{tpu_custom_call.1} parent=0 // pred_region
    _
  $region45: #{tpu_custom_call.1} parent=0 // pred_fallthru
    _
  %v41 = vld [vmem:[%s1] sm:$0xf]
  %v42 = vld [vmem:[%s1 + $0x4] sm:$0xf]
  %v43 = vld [vmem:[%s1 + $0x8] sm:$0xf]
  %v44 = vld [vmem:[%s1 + $0xc] sm:$0xf]
  %v45 = vld [vmem:[%s1 + $0x10] sm:$0xf]
  %v46 = vld [vmem:[%s1 + $0x14] sm:$0xf]
  %v47 = vld [vmem:[%s1 + $0x18] sm:$0xf]
  %v48 = vld [vmem:[%s1 + $0x1c] sm:$0xf]
  %v49 = vld [vmem:[%s1 + $0x20] sm:$0xf]
  %v50 = vld [vmem:[%s1 + $0x24] sm:$0xf]
  %v51 = vld [vmem:[%s1 + $0x28] sm:$0xf]
  %v52 = vld [vmem:[%s1 + $0x2c] sm:$0xf]
  %v53 = vld [vmem:[%s1 + $0x30] sm:$0xf]
  %v54 = vld [vmem:[%s1 + $0x34] sm:$0xf]
  %v55 = vld [vmem:[%s1 + $0x38] sm:$0xf]
  %v56 = vld [vmem:[%s1 + $0x3c] sm:$0xf]
  %v57 = vld [vmem:[%s1 + $0x40] sm:$0xf]
  %v58 = vld [vmem:[%s1 + $0x44] sm:$0xf]
  %v59 = vld [vmem:[%s1 + $0x48] sm:$0xf]
  %v60 = vld [vmem:[%s1 + $0x4c] sm:$0xf]
  %v61 = vld [vmem:[%s1 + $0x50] sm:$0xf]
  %v62 = vld [vmem:[%s1 + $0x54] sm:$0xf]
  %v63 = vld [vmem:[%s1 + $0x58] sm:$0xf]
  %v64 = vld [vmem:[%s1 + $0x5c] sm:$0xf]
  %v65 = vld [vmem:[%s1 + $0x60] sm:$0xf]
  %v66 = vld [vmem:[%s1 + $0x64] sm:$0xf]
  %v67 = vld [vmem:[%s1 + $0x68] sm:$0xf]
  %v68 = vld [vmem:[%s1 + $0x6c] sm:$0xf]
  %v69 = vld [vmem:[%s1 + $0x70] sm:$0xf]
  %v70 = vld [vmem:[%s1 + $0x74] sm:$0xf]
  %v71 = vld [vmem:[%s1 + $0x78] sm:$0xf]
  %v72 = vld [vmem:[%s1 + $0x7c] sm:$0xf]
  %v73 = vld [vmem:[%s1 + $0x80] sm:$0xf]
  %v74 = vld [vmem:[%s1 + $0x84] sm:$0xf]
  %v75 = vld [vmem:[%s1 + $0x88] sm:$0xf]
  %v76 = vld [vmem:[%s1 + $0x8c] sm:$0xf]
  %v77 = vld [vmem:[%s1 + $0x90] sm:$0xf]
  %v78 = vld [vmem:[%s1 + $0x94] sm:$0xf]
  %v79 = vld [vmem:[%s1 + $0x98] sm:$0xf]
  %v80 = vld [vmem:[%s1 + $0x9c] sm:$0xf]
  %v81 = vld [vmem:[%s1 + $0xa0] sm:$0xf]
  %v82 = vld [vmem:[%s1 + $0xa4] sm:$0xf]
  %v83 = vld [vmem:[%s1 + $0xa8] sm:$0xf]
  %v84 = vld [vmem:[%s1 + $0xac] sm:$0xf]
  %v85 = vld [vmem:[%s1 + $0xb0] sm:$0xf]
  %v86 = vld [vmem:[%s1 + $0xb4] sm:$0xf]
  %v87 = vld [vmem:[%s1 + $0xb8] sm:$0xf]
  %v88 = vld [vmem:[%s1 + $0xbc] sm:$0xf]
  %v89 = vld [vmem:[%s1 + $0xc0] sm:$0xf]
  %v90 = vld [vmem:[%s1 + $0xc4] sm:$0xf]
  %v91 = vld [vmem:[%s1 + $0xc8] sm:$0xf]
  %v92 = vld [vmem:[%s1 + $0xcc] sm:$0xf]
  %v93 = vld [vmem:[%s1 + $0xd0] sm:$0xf]
  %v94 = vld [vmem:[%s1 + $0xd4] sm:$0xf]
  %v95 = vld [vmem:[%s1 + $0xd8] sm:$0xf]
  %v96 = vld [vmem:[%s1 + $0xdc] sm:$0xf]
  %v97 = vld [vmem:[%s1 + $0xe0] sm:$0xf]
  %v98 = vld [vmem:[%s1 + $0xe4] sm:$0xf]
  %v99 = vld [vmem:[%s1 + $0xe8] sm:$0xf]
  %v100 = vld [vmem:[%s1 + $0xec] sm:$0xf]
  %v101 = vld [vmem:[%s1 + $0xf0] sm:$0xf]
  %v102 = vld [vmem:[%s1 + $0xf4] sm:$0xf]
  %v103 = vld [vmem:[%s1 + $0xf8] sm:$0xf]
  %v104 = vld [vmem:[%s1 + $0xfc] sm:$0xf]
  %v105 = vld [vmem:[%s2] sm:$0xf]
  %v106 = vld [vmem:[%s2 + $0x4] sm:$0xf]
  %v107 = vld [vmem:[%s2 + $0x8] sm:$0xf]
  %v108 = vld [vmem:[%s2 + $0xc] sm:$0xf]
  %v109 = vld [vmem:[%s2 + $0x10] sm:$0xf]
  %v110 = vld [vmem:[%s2 + $0x14] sm:$0xf]
  %v111 = vld [vmem:[%s2 + $0x18] sm:$0xf]
  %v112 = vld [vmem:[%s2 + $0x1c] sm:$0xf]
  %v113 = vld [vmem:[%s3] sm:$0xf]
  %v114 = vld [vmem:[%s3 + $0x4] sm:$0xf]
  %v115 = vld [vmem:[%s3 + $0x8] sm:$0xf]
  %v116 = vld [vmem:[%s3 + $0xc] sm:$0xf]
  %v117 = vld [vmem:[%s4] sm:$0xff]
  %v118 = vld [vmem:[%s4 + $0x8] sm:$0xff]
  %v119 = vld [vmem:[%s4 + $0x10] sm:$0xff]
  %v120 = vld [vmem:[%s4 + $0x18] sm:$0xff]
  %v121 = vld [vmem:[%s5] sm:$0xf]
  %v122 = vld [vmem:[%s5 + $0x4] sm:$0xf]
  %v123 = vld [vmem:[%s5 + $0x8] sm:$0xf]
  %v124 = vld [vmem:[%s5 + $0xc] sm:$0xf]
  %v125 = vld [vmem:[%s6] sm:$0xff]
  %v126 = vld [vmem:[%s6 + $0x8] sm:$0xff]
  %v127 = vld [vmem:[%s6 + $0x10] sm:$0xff]
  %v128 = vld [vmem:[%s6 + $0x18] sm:$0xff]
  %v129 = vld [vmem:[%s7] sm:$0xf]
  %v130 = vld [vmem:[%s8] sm:$0xff]
  %v131 = vld [vmem:[%s9] sm:$0x1]
  %v132 = vld [vmem:[%s10] sm:$0x7]
  %v133 = vld [vmem:[%s0] sm:$0xff]
  %v134 = vld [vmem:[%s0 + $0x8] sm:$0xff]
  %v137 = vunpack.c.l.b16 %v133
  %v138 = vunpack.c.h.b16 %v133
  %v139 = vunpack.c.l.b16 %v134
  %v140 = vunpack.c.h.b16 %v134
  %v141 = vpack.c.b16 %v137, %v137
  %v142 = vpack.c.b16 %v138, %v138
  %v143 = vpack.c.b16 %v139, %v139
  %v144 = vpack.c.b16 %v140, %v140
  %v213 = vunpack.c.l.b16 %v41
  %v214 = vunpack.c.l.b16 %v42
  %v215 = vunpack.c.l.b16 %v43
  %v216 = vunpack.c.l.b16 %v44
  %v217 = vunpack.c.l.b16 %v45
  %v218 = vunpack.c.l.b16 %v46
  %v219 = vunpack.c.l.b16 %v47
  %v220 = vunpack.c.l.b16 %v48
  %v221 = vunpack.c.l.b16 %v49
  %v222 = vunpack.c.l.b16 %v50
  %v223 = vunpack.c.l.b16 %v51
  %v224 = vunpack.c.l.b16 %v52
  %v225 = vunpack.c.l.b16 %v53
  %v226 = vunpack.c.l.b16 %v54
  %v227 = vunpack.c.l.b16 %v55
  %v228 = vunpack.c.l.b16 %v56
  %v229 = vunpack.c.l.b16 %v57
  %v230 = vunpack.c.l.b16 %v58
  %v231 = vunpack.c.l.b16 %v59
  %v232 = vunpack.c.l.b16 %v60
  %v233 = vunpack.c.l.b16 %v61
  %v234 = vunpack.c.l.b16 %v62
  %v235 = vunpack.c.l.b16 %v63
  %v236 = vunpack.c.l.b16 %v64
  %v237 = vunpack.c.l.b16 %v65
  %v238 = vunpack.c.l.b16 %v66
  %v239 = vunpack.c.l.b16 %v67
  %v240 = vunpack.c.l.b16 %v68
  %v241 = vunpack.c.l.b16 %v69
  %v242 = vunpack.c.l.b16 %v70
  %v243 = vunpack.c.l.b16 %v71
  %v244 = vunpack.c.l.b16 %v72
  %v245 = vunpack.c.l.b16 %v73
  %v246 = vunpack.c.l.b16 %v74
  %v247 = vunpack.c.l.b16 %v75
  %v248 = vunpack.c.l.b16 %v76
  %v249 = vunpack.c.l.b16 %v77
  %v250 = vunpack.c.l.b16 %v78
  %v251 = vunpack.c.l.b16 %v79
  %v252 = vunpack.c.l.b16 %v80
  %v253 = vunpack.c.l.b16 %v81
  %v254 = vunpack.c.l.b16 %v82
  %v255 = vunpack.c.l.b16 %v83
  %v256 = vunpack.c.l.b16 %v84
  %v257 = vunpack.c.l.b16 %v85
  %v258 = vunpack.c.l.b16 %v86
  %v259 = vunpack.c.l.b16 %v87
  %v260 = vunpack.c.l.b16 %v88
  %v261 = vunpack.c.l.b16 %v89
  %v262 = vunpack.c.l.b16 %v90
  %v263 = vunpack.c.l.b16 %v91
  %v264 = vunpack.c.l.b16 %v92
  %v265 = vunpack.c.l.b16 %v93
  %v266 = vunpack.c.l.b16 %v94
  %v267 = vunpack.c.l.b16 %v95
  %v268 = vunpack.c.l.b16 %v96
  %v269 = vunpack.c.l.b16 %v97
  %v270 = vunpack.c.l.b16 %v98
  %v271 = vunpack.c.l.b16 %v99
  %v272 = vunpack.c.l.b16 %v100
  %v273 = vunpack.c.l.b16 %v101
  %v274 = vunpack.c.l.b16 %v102
  %v275 = vunpack.c.l.b16 %v103
  %v276 = vunpack.c.l.b16 %v104
  %v277 = vpack.c.b16 %v214, %v213
  %v278 = vpack.c.b16 %v216, %v215
  %v279 = vpack.c.b16 %v218, %v217
  %v280 = vpack.c.b16 %v220, %v219
  %v281 = vpack.c.b16 %v222, %v221
  %v282 = vpack.c.b16 %v224, %v223
  %v283 = vpack.c.b16 %v226, %v225
  %v284 = vpack.c.b16 %v228, %v227
  %v285 = vpack.c.b16 %v230, %v229
  %v286 = vpack.c.b16 %v232, %v231
  %v287 = vpack.c.b16 %v234, %v233
  %v288 = vpack.c.b16 %v236, %v235
  %v289 = vpack.c.b16 %v238, %v237
  %v290 = vpack.c.b16 %v240, %v239
  %v291 = vpack.c.b16 %v242, %v241
  %v292 = vpack.c.b16 %v244, %v243
  %v293 = vpack.c.b16 %v246, %v245
  %v294 = vpack.c.b16 %v248, %v247
  %v295 = vpack.c.b16 %v250, %v249
  %v296 = vpack.c.b16 %v252, %v251
  %v297 = vpack.c.b16 %v254, %v253
  %v298 = vpack.c.b16 %v256, %v255
  %v299 = vpack.c.b16 %v258, %v257
  %v300 = vpack.c.b16 %v260, %v259
  %v301 = vpack.c.b16 %v262, %v261
  %v302 = vpack.c.b16 %v264, %v263
  %v303 = vpack.c.b16 %v266, %v265
  %v304 = vpack.c.b16 %v268, %v267
  %v305 = vpack.c.b16 %v270, %v269
  %v306 = vpack.c.b16 %v272, %v271
  %v307 = vpack.c.b16 %v274, %v273
  %v308 = vpack.c.b16 %v276, %v275
  %341 = vmatpush.bf16.msra.mxu0 %v284
  %342 = vmatpush.bf16.msra.mxu0 %v283
  %343 = vmatpush.bf16.msra.mxu0 %v282
  %344 = vmatpush.bf16.msra.mxu0 %v281
  %345 = vmatpush.bf16.msra.mxu0 %v280
  %346 = vmatpush.bf16.msra.mxu0 %v279
  %347 = vmatpush.bf16.msra.mxu0 %v278
  %348 = vmatpush.bf16.msra.mxu0 %v277
  %349 = vmatmul.bf16.gmra.mxu0 %v141
  %v350 = vpop.f32.mrf.mxu0
  %v351 = vadd.f32 0.0, %v350
  %v352 = vpop.f32.mrf.mxu0
  %353 = vdwg.mxu0
  %354 = vmatpush.bf16.msra.mxu0 %v292
  %355 = vmatpush.bf16.msra.mxu0 %v291
  %356 = vmatpush.bf16.msra.mxu0 %v290
  %357 = vmatpush.bf16.msra.mxu0 %v289
  %358 = vmatpush.bf16.msra.mxu0 %v288
  %359 = vmatpush.bf16.msra.mxu0 %v287
  %360 = vmatpush.bf16.msra.mxu0 %v286
  %361 = vmatpush.bf16.msra.mxu0 %v285
  %362 = vmatmul.bf16.gmra.mxu0 %v142
  %v363 = vpop.f32.mrf.mxu0
  %v364 = vadd.f32 %v351, %v363
  %v365 = vpop.f32.mrf.mxu0
  %366 = vdwg.mxu0
  %367 = vmatpush.bf16.msra.mxu0 %v300
  %368 = vmatpush.bf16.msra.mxu0 %v299
  %369 = vmatpush.bf16.msra.mxu0 %v298
  %370 = vmatpush.bf16.msra.mxu0 %v297
  %371 = vmatpush.bf16.msra.mxu0 %v296
  %372 = vmatpush.bf16.msra.mxu0 %v295
  %373 = vmatpush.bf16.msra.mxu0 %v294
  %374 = vmatpush.bf16.msra.mxu0 %v293
  %375 = vmatmul.bf16.gmra.mxu0 %v143
  %v376 = vpop.f32.mrf.mxu0
  %v377 = vadd.f32 %v364, %v376
  %v378 = vpop.f32.mrf.mxu0
  %379 = vdwg.mxu0
  %380 = vmatpush.bf16.msra.mxu0 %v308
  %381 = vmatpush.bf16.msra.mxu0 %v307
  %382 = vmatpush.bf16.msra.mxu0 %v306
  %383 = vmatpush.bf16.msra.mxu0 %v305
  %384 = vmatpush.bf16.msra.mxu0 %v304
  %385 = vmatpush.bf16.msra.mxu0 %v303
  %386 = vmatpush.bf16.msra.mxu0 %v302
  %387 = vmatpush.bf16.msra.mxu0 %v301
  %388 = vmatmul.bf16.gmra.mxu0 %v144
  %v389 = vpop.f32.mrf.mxu0
  %v390 = vadd.f32 %v377, %v389
  %v391 = vpop.f32.mrf.mxu0
  %392 = vdwg.mxu0
  %v393 = vpack.c.bf16 %v390, %v390
  %395 = vset.pattern.permute.xlu0 0
  %396 = vperm.xlu0 %395, %v117
  %v397 = vpop.permute.xlu0 %396
  %400 = vset.pattern.permute.xlu0 0
  %401 = vperm.xlu0 %400, %v118
  %v402 = vpop.permute.xlu0 %401
  %405 = vset.pattern.permute.xlu0 0
  %406 = vperm.xlu0 %405, %v119
  %v407 = vpop.permute.xlu0 %406
  %410 = vset.pattern.permute.xlu0 0
  %411 = vperm.xlu0 %410, %v120
  %v412 = vpop.permute.xlu0 %411
  %v418 = vunpack.c.l.b16 %v113
  %v419 = vunpack.c.l.b16 %v114
  %v420 = vunpack.c.l.b16 %v115
  %v421 = vunpack.c.l.b16 %v116
  %v422 = vpack.c.b16 %v419, %v418
  %v423 = vpack.c.b16 %v421, %v420
  %vm424 = vcmask 64512
  %v426 = vsel %vm424, %v422, 0
  %v429 = vsel %vm424, %v423, 0
  %vm431 = vcmask 1043456
  %v433 = vsel %vm431, %v393, 0
  %435 = vmatpush.bf16.msra.mxu0 0
  %436 = vmatpush.bf16.msra.mxu0 0
  %437 = vmatpush.bf16.msra.mxu0 0
  %438 = vmatpush.bf16.msra.mxu0 0
  %439 = vmatpush.bf16.msra.mxu0 0
  %440 = vmatpush.bf16.msra.mxu0 0
  %441 = vmatpush.bf16.msra.mxu0 0
  %442 = vmatpush.bf16.msra.mxu0 %v433
  %443 = vmatmul.bf16.gmra.mxu0 %v426
  %v444 = vpop.f32.mrf.mxu0
  %v445 = vadd.f32 %v397, %v444
  %v446 = vpop.f32.mrf.mxu0
  %v447 = vadd.f32 %v402, %v446
  %448 = vmatmul.bf16.gmra.mxu0 %v429
  %v449 = vpop.f32.mrf.mxu0
  %v450 = vadd.f32 %v407, %v449
  %v451 = vpop.f32.mrf.mxu0
  %v452 = vadd.f32 %v412, %v451
  %453 = vdwg.mxu0
  %v454 = vmax.f32 %v445, 0.0
  %v455 = vmax.f32 %v447, 0.0
  %v456 = vmax.f32 %v450, 0.0
  %v457 = vmax.f32 %v452, 0.0
  %v458 = vpack.c.bf16 %v455, %v454
  %v459 = vpack.c.bf16 %v457, %v456
  %v468 = vunpack.c.l.b16 %v105
  %v469 = vunpack.c.l.b16 %v106
  %v470 = vunpack.c.l.b16 %v107
  %v471 = vunpack.c.l.b16 %v108
  %v472 = vunpack.c.l.b16 %v109
  %v473 = vunpack.c.l.b16 %v110
  %v474 = vunpack.c.l.b16 %v111
  %v475 = vunpack.c.l.b16 %v112
  %v476 = vpack.c.b16 %v469, %v468
  %v477 = vpack.c.b16 %v471, %v470
  %v478 = vpack.c.b16 %v473, %v472
  %v479 = vpack.c.b16 %v475, %v474
  %vm484 = vcmask 523264
  %v486 = vsel %vm484, %v458, 0
  %v489 = vsel %vm484, %v459, 0
  %491 = vmatpush.bf16.msra.mxu0 0
  %492 = vmatpush.bf16.msra.mxu0 0
  %493 = vmatpush.bf16.msra.mxu0 0
  %494 = vmatpush.bf16.msra.mxu0 0
  %495 = vmatpush.bf16.msra.mxu0 %v479
  %496 = vmatpush.bf16.msra.mxu0 %v478
  %497 = vmatpush.bf16.msra.mxu0 %v477
  %498 = vmatpush.bf16.msra.mxu0 %v476
  %499 = vmatmul.bf16.gmra.mxu0 %v486
  %v500 = vpop.f32.mrf.mxu0
  %v501 = vadd.f32 0.0, %v500
  %v502 = vpop.f32.mrf.mxu0
  %v503 = vadd.f32 0.0, %v502
  %504 = vmatmul.bf16.gmra.mxu0 %v489
  %v505 = vpop.f32.mrf.mxu0
  %v506 = vadd.f32 0.0, %v505
  %v507 = vpop.f32.mrf.mxu0
  %v508 = vadd.f32 0.0, %v507
  %509 = vdwg.mxu0
  %v510 = vpack.c.bf16 %v503, %v501
  %v511 = vpack.c.bf16 %v508, %v506
  %513 = vset.pattern.permute.xlu0 0
  %514 = vperm.xlu0 %513, %v125
  %v515 = vpop.permute.xlu0 %514
  %518 = vset.pattern.permute.xlu0 0
  %519 = vperm.xlu0 %518, %v126
  %v520 = vpop.permute.xlu0 %519
  %523 = vset.pattern.permute.xlu0 0
  %524 = vperm.xlu0 %523, %v127
  %v525 = vpop.permute.xlu0 %524
  %528 = vset.pattern.permute.xlu0 0
  %529 = vperm.xlu0 %528, %v128
  %v530 = vpop.permute.xlu0 %529
  %v536 = vunpack.c.l.b16 %v121
  %v537 = vunpack.c.l.b16 %v122
  %v538 = vunpack.c.l.b16 %v123
  %v539 = vunpack.c.l.b16 %v124
  %v540 = vpack.c.b16 %v537, %v536
  %v541 = vpack.c.b16 %v539, %v538
  %vm542 = vcmask 261120
  %v544 = vsel %vm542, %v540, 0
  %v547 = vsel %vm542, %v541, 0
  %549 = vmatpush.bf16.msra.mxu0 0
  %550 = vmatpush.bf16.msra.mxu0 0
  %551 = vmatpush.bf16.msra.mxu0 0
  %552 = vmatpush.bf16.msra.mxu0 0
  %553 = vmatpush.bf16.msra.mxu0 0
  %554 = vmatpush.bf16.msra.mxu0 0
  %555 = vmatpush.bf16.msra.mxu0 %v511
  %556 = vmatpush.bf16.msra.mxu0 %v510
  %557 = vmatmul.bf16.gmra.mxu0 %v544
  %v558 = vpop.f32.mrf.mxu0
  %v559 = vadd.f32 %v515, %v558
  %v560 = vpop.f32.mrf.mxu0
  %v561 = vadd.f32 %v520, %v560
  %562 = vmatmul.bf16.gmra.mxu0 %v547
  %v563 = vpop.f32.mrf.mxu0
  %v564 = vadd.f32 %v525, %v563
  %v565 = vpop.f32.mrf.mxu0
  %v566 = vadd.f32 %v530, %v565
  %567 = vdwg.mxu0
  %v568 = vmax.f32 %v559, 0.0
  %v569 = vmax.f32 %v561, 0.0
  %v570 = vmax.f32 %v564, 0.0
  %v571 = vmax.f32 %v566, 0.0
  %v572 = vpack.c.bf16 %v569, %v568
  %v573 = vpack.c.bf16 %v571, %v570
  %v575 = vsel %vm542, %v129, 0
  %577 = vmatpush.bf16.msra.mxu0 0
  %578 = vmatpush.bf16.msra.mxu0 0
  %579 = vmatpush.bf16.msra.mxu0 0
  %580 = vmatpush.bf16.msra.mxu0 0
  %581 = vmatpush.bf16.msra.mxu0 0
  %582 = vmatpush.bf16.msra.mxu0 0
  %583 = vmatpush.bf16.msra.mxu0 %v573
  %584 = vmatpush.bf16.msra.mxu0 %v572
  %585 = vmatmul.bf16.gmra.mxu0 %v575
  %v586 = vpop.f32.mrf.mxu0
  %v587 = vadd.f32 0.0, %v586
  %v588 = vpop.f32.mrf.mxu0
  %589 = vdwg.mxu0
  %v591 = vperm.slane %v131, 0
  %v593 = vmul.f32 %v587, %v591
  %v594 = vsel %vm484, %v593, 0.0
  %595 = vadd.xlane.f32.xlu0 %v594
  %v596 = vpop.xlane.xlu0 %595
  %v597 = vadd.f32 %v596, %v130
  %vm598 = vcmask 7168
  %599 = vst.msk [vmem:[%s11] sm:$0xff] %vm598, %v597
  %v600 = vmul.f32 %v597, 1.442695
  %v601 = vpow.pop %v600
  %v602 = vand.u32 2147483647, %v597
  %vm603 = vcmp.le.f32.partialorder %v602, 0.7853982
  %vm604 = vcmp.lt.s32.totalorder %v597, 0
  %v605 = vand.u32 %v597, 2139095040
  %v606 = vshrl.u32 %v605, 23
  %v607 = vsub.s32 %v606, 127
  %v608 = vand.u32 2147483647, %v597
  %v609 = vand.u32 %v608, 8388607
  %v610 = vor.u32 %v609, 8388608
  %v611 = vsub.s32 0, %v610
  %v612 = vadd.s32 %v607, 1
  %vm613 = vcmp.gt.s32.totalorder %v612, 0
  %v614 = vsel %vm613, %v612, 0
  %v615 = vshrl.u32 %v614, 5
  %v616 = vand.u32 %v614, 31
  %v617 = vsub.s32 32, %v616
  %v618 = vshrl.u32 683565275, %v617
  %v619 = vshll.u32 683565275, %v616
  %v620 = vshrl.u32 2475754826, %v617
  %v621 = vor.u32 %v619, %v620
  %v622 = vshll.u32 2475754826, %v616
  %v623 = vshrl.u32 2131351028, %v617
  %v624 = vor.u32 %v622, %v623
  %v625 = vshll.u32 2131351028, %v616
  %v626 = vshrl.u32 2102212464, %v617
  %v627 = vor.u32 %v625, %v626
  %v628 = vshll.u32 2102212464, %v616
  %v629 = vshrl.u32 920167782, %v617
  %v630 = vor.u32 %v628, %v629
  %v631 = vshll.u32 920167782, %v616
  %v632 = vshrl.u32 1326507024, %v617
  %v633 = vor.u32 %v631, %v632
  %vm634 = vcmp.lt.s32.totalorder %v615, 1
  %vm635 = vcmp.lt.s32.totalorder %v615, 2
  %vm636 = vcmp.lt.s32.totalorder %v615, 3
  %vm637 = vcmp.lt.s32.totalorder %v615, 4
  %v638 = vsel %vm634, %v618, %v621
  %v639 = vsel %vm637, %v627, 2102212464
  %v640 = vsel %vm636, %v624, %v639
  %v641 = vsel %vm635, %v638, %v640
  %v642 = vsel %vm634, %v621, %v624
  %v643 = vsel %vm637, %v630, 920167782
  %v644 = vsel %vm636, %v627, %v643
  %v645 = vsel %vm635, %v642, %v644
  %v646 = vsel %vm634, %v624, %v627
  %v647 = vsel %vm637, %v633, 1326507024
  %v648 = vsel %vm636, %v630, %v647
  %v649 = vsel %vm635, %v646, %v648
  %v650 = vshll.u32 %v610, 8
  %v651 = vand.u32 %v650, 65535
  %v652 = vshrl.u32 %v650, 16
  %v653 = vand.u32 %v649, 65535
  %v654 = vshrl.u32 %v649, 16
  %v655 = vmul.u32 %v651, %v653
  %v656 = vmul.u32 %v651, %v654
  %v657 = vmul.u32 %v652, %v653
  %v658 = vmul.u32 %v652, %v654
  %v659 = vshll.u32 %v656, 16
  %v660 = vshrl.u32 %v656, 16
  %v661 = vshll.u32 %v657, 16
  %v662 = vshrl.u32 %v657, 16
  %vm663 = vc.u32 %v655, %v659
  %v664 = vsel %vm663, 1, 0
  %v665 = vadd.s32 %v655, %v659
  %v666 = vadd.s32 %v658, %v664
  %vm667 = vc.u32 %v665, %v661
  %v668 = vsel %vm667, 1, 0
  %v669 = vadd.s32 %v665, %v661
  %v670 = vadd.s32 %v666, %v668
  %v671 = vadd.s32 %v670, %v660
  %v672 = vadd.s32 %v671, %v662
  %v673 = vand.u32 %v650, 65535
  %v674 = vshrl.u32 %v650, 16
  %v675 = vand.u32 %v645, 65535
  %v676 = vshrl.u32 %v645, 16
  %v677 = vmul.u32 %v673, %v675
  %v678 = vmul.u32 %v673, %v676
  %v679 = vmul.u32 %v674, %v675
  %v680 = vmul.u32 %v674, %v676
  %v681 = vshll.u32 %v678, 16
  %v682 = vshrl.u32 %v678, 16
  %v683 = vshll.u32 %v679, 16
  %v684 = vshrl.u32 %v679, 16
  %vm685 = vc.u32 %v677, %v681
  %v686 = vsel %vm685, 1, 0
  %v687 = vadd.s32 %v677, %v681
  %v688 = vadd.s32 %v680, %v686
  %vm689 = vc.u32 %v687, %v683
  %v690 = vsel %vm689, 1, 0
  %v691 = vadd.s32 %v687, %v683
  %v692 = vadd.s32 %v688, %v690
  %v693 = vadd.s32 %v692, %v682
  %v694 = vadd.s32 %v693, %v684
  %v695 = vmul.u32 %v650, %v641
  %v696 = vadd.s32 %v672, %v691
  %vm697 = vc.u32 %v672, %v691
  %v698 = vadd.s32 %v694, 1
  %v699 = vsel %vm697, %v698, %v694
  %v700 = vadd.s32 %v695, %v699
  %v701 = vadd.s32 %v700, 536870912
  %v702 = vshrl.u32 %v701, 30
  %v703 = vshll.u32 %v702, 30
  %v704 = vsub.s32 %v700, %v703
  %vm705 = vcmp.lt.s32.totalorder %v704, 0
  %v706 = vsub.s32 0, %v704
  %v707 = vsel %vm705, %v706, %v704
  %v708 = vclz %v707
  %v709 = vsub.s32 %v708, 2
  %vm710 = vcmp.gt.s32.totalorder 0, %v709
  %v711 = vsel %vm710, 0, %v709
  %v712 = vsub.s32 32, %v711
  %v713 = vshll.u32 %v704, %v711
  %v714 = vshrl.u32 %v696, %v712
  %v715 = vor.u32 %v713, %v714
  %v716 = vsub.s32 4294967266, %v711
  %v717 = vadd.s32 %v716, 127
  %v718 = vshll.u32 %v717, 23
  %v719 = vor.u32 4788187, %v718
  %v720 = vand.u32 2147483647, %v719
  %v722 = vcvt.s32.f32 %v715
  %v723 = vmul.f32 %v722, %v720
  %v724 = vxor.u32 %v723, 2147483648
  %v725 = vsel %vm604, %v724, %v723
  %v726 = vsub.s32 4, %v702
  %v727 = vsel %vm604, %v726, %v702
  %v728 = vsel %vm603, %v597, %v725
  %v729 = vsel %vm603, 0, %v727
  %v730 = vmul.f32 %v728, %v728
  %v731 = vmul.f32 %v730, -0.001358992
  %v732 = vadd.f32 %v731, 0.041655596
  %v733 = vmul.f32 %v730, %v732
  %v734 = vadd.f32 %v733, -0.4999988
  %v735 = vmul.f32 %v730, %v734
  %v736 = vadd.f32 1.0, %v735
  %v737 = vmul.f32 %v728, %v728
  %v738 = vmul.f32 %v737, -0.00019511016
  %v739 = vadd.f32 %v738, 0.008332121
  %v740 = vmul.f32 %v737, %v739
  %v741 = vadd.f32 %v740, -0.16666654
  %v742 = vmul.f32 %v737, %v741
  %v743 = vadd.f32 %v742, 1.0
  %v744 = vmul.f32 %v743, %v728
  %vm745 = vweird.f32 %v597
  %v746 = vand.u32 %v729, 3
  %vm747 = vcmp.lt.s32.totalorder %v746, 2
  %vm748 = vcmp.eq.s32.totalorder %v746, 0
  %v749 = vxor.u32 %v744, 2147483648
  %v750 = vsel %vm748, %v736, %v749
  %vm751 = vcmp.eq.s32.totalorder %v746, 2
  %v752 = vxor.u32 %v736, 2147483648
  %v753 = vsel %vm751, %v752, %v744
  %v754 = vsel %vm747, %v750, %v753
  %v755 = vsel %vm745, nan, %v754
  %v756 = vand.u32 2147483647, %v597
  %vm757 = vcmp.le.f32.partialorder %v756, 0.7853982
  %vm758 = vcmp.lt.s32.totalorder %v597, 0
  %v759 = vand.u32 %v597, 2139095040
  %v760 = vshrl.u32 %v759, 23
  %v761 = vsub.s32 %v760, 127
  %v762 = vand.u32 2147483647, %v597
  %v763 = vand.u32 %v762, 8388607
  %v764 = vor.u32 %v763, 8388608
  %v765 = vsub.s32 0, %v764
  %v766 = vadd.s32 %v761, 1
  %vm767 = vcmp.gt.s32.totalorder %v766, 0
  %v768 = vsel %vm767, %v766, 0
  %v769 = vshrl.u32 %v768, 5
  %v770 = vand.u32 %v768, 31
  %v771 = vsub.s32 32, %v770
  %v772 = vshrl.u32 683565275, %v771
  %v773 = vshll.u32 683565275, %v770
  %v774 = vshrl.u32 2475754826, %v771
  %v775 = vor.u32 %v773, %v774
  %v776 = vshll.u32 2475754826, %v770
  %v777 = vshrl.u32 2131351028, %v771
  %v778 = vor.u32 %v776, %v777
  %v779 = vshll.u32 2131351028, %v770
  %v780 = vshrl.u32 2102212464, %v771
  %v781 = vor.u32 %v779, %v780
  %v782 = vshll.u32 2102212464, %v770
  %v783 = vshrl.u32 920167782, %v771
  %v784 = vor.u32 %v782, %v783
  %v785 = vshll.u32 920167782, %v770
  %v786 = vshrl.u32 1326507024, %v771
  %v787 = vor.u32 %v785, %v786
  %vm788 = vcmp.lt.s32.totalorder %v769, 1
  %vm789 = vcmp.lt.s32.totalorder %v769, 2
  %vm790 = vcmp.lt.s32.totalorder %v769, 3
  %vm791 = vcmp.lt.s32.totalorder %v769, 4
  %v792 = vsel %vm788, %v772, %v775
  %v793 = vsel %vm791, %v781, 2102212464
  %v794 = vsel %vm790, %v778, %v793
  %v795 = vsel %vm789, %v792, %v794
  %v796 = vsel %vm788, %v775, %v778
  %v797 = vsel %vm791, %v784, 920167782
  %v798 = vsel %vm790, %v781, %v797
  %v799 = vsel %vm789, %v796, %v798
  %v800 = vsel %vm788, %v778, %v781
  %v801 = vsel %vm791, %v787, 1326507024
  %v802 = vsel %vm790, %v784, %v801
  %v803 = vsel %vm789, %v800, %v802
  %v804 = vshll.u32 %v764, 8
  %v805 = vand.u32 %v804, 65535
  %v806 = vshrl.u32 %v804, 16
  %v807 = vand.u32 %v803, 65535
  %v808 = vshrl.u32 %v803, 16
  %v809 = vmul.u32 %v805, %v807
  %v810 = vmul.u32 %v805, %v808
  %v811 = vmul.u32 %v806, %v807
  %v812 = vmul.u32 %v806, %v808
  %v813 = vshll.u32 %v810, 16
  %v814 = vshrl.u32 %v810, 16
  %v815 = vshll.u32 %v811, 16
  %v816 = vshrl.u32 %v811, 16
  %vm817 = vc.u32 %v809, %v813
  %v818 = vsel %vm817, 1, 0
  %v819 = vadd.s32 %v809, %v813
  %v820 = vadd.s32 %v812, %v818
  %vm821 = vc.u32 %v819, %v815
  %v822 = vsel %vm821, 1, 0
  %v823 = vadd.s32 %v819, %v815
  %v824 = vadd.s32 %v820, %v822
  %v825 = vadd.s32 %v824, %v814
  %v826 = vadd.s32 %v825, %v816
  %v827 = vand.u32 %v804, 65535
  %v828 = vshrl.u32 %v804, 16
  %v829 = vand.u32 %v799, 65535
  %v830 = vshrl.u32 %v799, 16
  %v831 = vmul.u32 %v827, %v829
  %v832 = vmul.u32 %v827, %v830
  %v833 = vmul.u32 %v828, %v829
  %v834 = vmul.u32 %v828, %v830
  %v835 = vshll.u32 %v832, 16
  %v836 = vshrl.u32 %v832, 16
  %v837 = vshll.u32 %v833, 16
  %v838 = vshrl.u32 %v833, 16
  %vm839 = vc.u32 %v831, %v835
  %v840 = vsel %vm839, 1, 0
  %v841 = vadd.s32 %v831, %v835
  %v842 = vadd.s32 %v834, %v840
  %vm843 = vc.u32 %v841, %v837
  %v844 = vsel %vm843, 1, 0
  %v845 = vadd.s32 %v841, %v837
  %v846 = vadd.s32 %v842, %v844
  %v847 = vadd.s32 %v846, %v836
  %v848 = vadd.s32 %v847, %v838
  %v849 = vmul.u32 %v804, %v795
  %v850 = vadd.s32 %v826, %v845
  %vm851 = vc.u32 %v826, %v845
  %v852 = vadd.s32 %v848, 1
  %v853 = vsel %vm851, %v852, %v848
  %v854 = vadd.s32 %v849, %v853
  %v855 = vadd.s32 %v854, 536870912
  %v856 = vshrl.u32 %v855, 30
  %v857 = vshll.u32 %v856, 30
  %v858 = vsub.s32 %v854, %v857
  %vm859 = vcmp.lt.s32.totalorder %v858, 0
  %v860 = vsub.s32 0, %v858
  %v861 = vsel %vm859, %v860, %v858
  %v862 = vclz %v861
  %v863 = vsub.s32 %v862, 2
  %vm864 = vcmp.gt.s32.totalorder 0, %v863
  %v865 = vsel %vm864, 0, %v863
  %v866 = vsub.s32 32, %v865
  %v867 = vshll.u32 %v858, %v865
  %v868 = vshrl.u32 %v850, %v866
  %v869 = vor.u32 %v867, %v868
  %v870 = vsub.s32 4294967266, %v865
  %v871 = vadd.s32 %v870, 127
  %v872 = vshll.u32 %v871, 23
  %v873 = vor.u32 4788187, %v872
  %v874 = vand.u32 2147483647, %v873
  %v876 = vcvt.s32.f32 %v869
  %v877 = vmul.f32 %v876, %v874
  %v878 = vxor.u32 %v877, 2147483648
  %v879 = vsel %vm758, %v878, %v877
  %v880 = vsub.s32 4, %v856
  %v881 = vsel %vm758, %v880, %v856
  %v882 = vsel %vm757, %v597, %v879
  %v883 = vsel %vm757, 0, %v881
  %v884 = vmul.f32 %v882, %v882
  %v885 = vmul.f32 %v884, -0.001358992
  %v886 = vadd.f32 %v885, 0.041655596
  %v887 = vmul.f32 %v884, %v886
  %v888 = vadd.f32 %v887, -0.4999988
  %v889 = vmul.f32 %v884, %v888
  %v890 = vadd.f32 1.0, %v889
  %v891 = vmul.f32 %v882, %v882
  %v892 = vmul.f32 %v891, -0.00019511016
  %v893 = vadd.f32 %v892, 0.008332121
  %v894 = vmul.f32 %v891, %v893
  %v895 = vadd.f32 %v894, -0.16666654
  %v896 = vmul.f32 %v891, %v895
  %v897 = vadd.f32 %v896, 1.0
  %v898 = vmul.f32 %v897, %v882
  %vm899 = vweird.f32 %v597
  %v900 = vadd.s32 %v883, 3
  %v901 = vand.u32 %v900, 3
  %vm902 = vcmp.lt.s32.totalorder %v901, 2
  %vm903 = vcmp.eq.s32.totalorder %v901, 0
  %v904 = vxor.u32 %v898, 2147483648
  %v905 = vsel %vm903, %v890, %v904
  %vm906 = vcmp.eq.s32.totalorder %v901, 2
  %v907 = vxor.u32 %v890, 2147483648
  %v908 = vsel %vm906, %v907, %v898
  %v909 = vsel %vm902, %v905, %v908
  %v910 = vsel %vm899, nan, %v909
  %912 = vset.pattern.permute.xlu0 0
  %913 = vperm.xlu0 %912, %v755
  %v914 = vpop.permute.xlu0 %913
  %v917 = vrot.slane %v132, 6
  %v919 = vmul.f32 %v914, %v917
  %921 = vset.pattern.permute.xlu0 0
  %922 = vperm.xlu0 %921, %v910
  %v923 = vpop.permute.xlu0 %922
  %v925 = vrot.slane %v132, 7
  %v927 = vmul.f32 %v923, %v925
  %v928 = vsub.f32 %v919, %v927
  %v929 = vmul.f32 %v923, %v917
  %v930 = vmul.f32 %v914, %v925
  %v931 = vadd.f32 %v929, %v930
  %v932 = vrot.slane %v132, 4
  %v934 = vmul.f32 %v914, %v932
  %v936 = vrot.slane %v931, 7
  %v938 = vmul.f32 %v923, %v936
  %v939 = vadd.f32 %v934, %v938
  %v940 = vsub.f32 0.0, %v910
  %942 = vset.pattern.permute.xlu0 0
  %943 = vperm.xlu0 %942, %v940
  %v944 = vpop.permute.xlu0 %943
  %v946 = vmul.f32 %v944, %v932
  %v947 = vmul.f32 %v914, %v936
  %v948 = vadd.f32 %v946, %v947
  %v950 = vrot.slane %v939, 7
  %v952 = vmul.f32 %v914, %v950
  %v954 = vrot.slane %v928, 6
  %v956 = vmul.f32 %v923, %v954
  %v957 = vsub.f32 %v952, %v956
  %v958 = vmul.f32 %v923, %v950
  %v959 = vmul.f32 %v914, %v954
  %v960 = vadd.f32 %v958, %v959
  %962 = vset.pattern.permute.xlu0 0
  %963 = vperm.xlu0 %962, %v601
  %v964 = vpop.permute.xlu0 %963
  %v967 = vrot.slane %v957, 7
  %v969 = vmul.f32 %v964, %v967
  %971 = vset.pattern.permute.xlu0 0
  %972 = vperm.xlu0 %971, %v597
  %v973 = vpop.permute.xlu0 %972
  %v974 = vrot.slane %v973, 2
  %v976 = vadd.f32 %v969, %v974
  %977 = vst [vmem:[%s12 - $0x6] sm:$0x40] %v976
  %v979 = vrot.slane %v960, 7
  %v981 = vmul.f32 %v964, %v979
  %v982 = vrot.slane %v973, 3
  %v984 = vadd.f32 %v981, %v982
  %985 = vst [vmem:[%s12 - $0x5] sm:$0x40] %v984
  %v987 = vrot.slane %v948, 6
  %v989 = vmul.f32 %v964, %v987
  %v990 = vrot.slane %v973, 4
  %v992 = vadd.f32 %v989, %v990
  %993 = vst [vmem:[%s12 - $0x4] sm:$0x40] %v992
  %s994 = scalar_lea.vmem %s0, 16
  %v995 = vld [vmem:[%s994] sm:$0xff]
  %v996 = vld [vmem:[%s994 + $0x8] sm:$0xff]
  %v999 = vunpack.c.l.b16 %v995
  %v1000 = vunpack.c.h.b16 %v995
  %v1001 = vunpack.c.l.b16 %v996
  %v1002 = vunpack.c.h.b16 %v996
  %v1003 = vpack.c.b16 %v999, %v999
  %v1004 = vpack.c.b16 %v1000, %v1000
  %v1005 = vpack.c.b16 %v1001, %v1001
  %v1006 = vpack.c.b16 %v1002, %v1002
  %1011 = vmatpush.bf16.msra.mxu0 %v284
  %1012 = vmatpush.bf16.msra.mxu0 %v283
  %1013 = vmatpush.bf16.msra.mxu0 %v282
  %1014 = vmatpush.bf16.msra.mxu0 %v281
  %1015 = vmatpush.bf16.msra.mxu0 %v280
  %1016 = vmatpush.bf16.msra.mxu0 %v279
  %1017 = vmatpush.bf16.msra.mxu0 %v278
  %1018 = vmatpush.bf16.msra.mxu0 %v277
  %1019 = vmatmul.bf16.gmra.mxu0 %v1003
  %v1020 = vpop.f32.mrf.mxu0
  %v1021 = vadd.f32 0.0, %v1020
  %v1022 = vpop.f32.mrf.mxu0
  %1023 = vdwg.mxu0
  %1024 = vmatpush.bf16.msra.mxu0 %v292
  %1025 = vmatpush.bf16.msra.mxu0 %v291
  %1026 = vmatpush.bf16.msra.mxu0 %v290
  %1027 = vmatpush.bf16.msra.mxu0 %v289
  %1028 = vmatpush.bf16.msra.mxu0 %v288
  %1029 = vmatpush.bf16.msra.mxu0 %v287
  %1030 = vmatpush.bf16.msra.mxu0 %v286
  %1031 = vmatpush.bf16.msra.mxu0 %v285
  %1032 = vmatmul.bf16.gmra.mxu0 %v1004
  %v1033 = vpop.f32.mrf.mxu0
  %v1034 = vadd.f32 %v1021, %v1033
  %v1035 = vpop.f32.mrf.mxu0
  %1036 = vdwg.mxu0
  %1037 = vmatpush.bf16.msra.mxu0 %v300
  %1038 = vmatpush.bf16.msra.mxu0 %v299
  %1039 = vmatpush.bf16.msra.mxu0 %v298
  %1040 = vmatpush.bf16.msra.mxu0 %v297
  %1041 = vmatpush.bf16.msra.mxu0 %v296
  %1042 = vmatpush.bf16.msra.mxu0 %v295
  %1043 = vmatpush.bf16.msra.mxu0 %v294
  %1044 = vmatpush.bf16.msra.mxu0 %v293
  %1045 = vmatmul.bf16.gmra.mxu0 %v1005
  %v1046 = vpop.f32.mrf.mxu0
  %v1047 = vadd.f32 %v1034, %v1046
  %v1048 = vpop.f32.mrf.mxu0
  %1049 = vdwg.mxu0
  %1050 = vmatpush.bf16.msra.mxu0 %v308
  %1051 = vmatpush.bf16.msra.mxu0 %v307
  %1052 = vmatpush.bf16.msra.mxu0 %v306
  %1053 = vmatpush.bf16.msra.mxu0 %v305
  %1054 = vmatpush.bf16.msra.mxu0 %v304
  %1055 = vmatpush.bf16.msra.mxu0 %v303
  %1056 = vmatpush.bf16.msra.mxu0 %v302
  %1057 = vmatpush.bf16.msra.mxu0 %v301
  %1058 = vmatmul.bf16.gmra.mxu0 %v1006
  %v1059 = vpop.f32.mrf.mxu0
  %v1060 = vadd.f32 %v1047, %v1059
  %v1061 = vpop.f32.mrf.mxu0
  %1062 = vdwg.mxu0
  %v1063 = vpack.c.bf16 %v1060, %v1060
  %v1065 = vsel %vm431, %v1063, 0
  %1067 = vmatpush.bf16.msra.mxu0 0
  %1068 = vmatpush.bf16.msra.mxu0 0
  %1069 = vmatpush.bf16.msra.mxu0 0
  %1070 = vmatpush.bf16.msra.mxu0 0
  %1071 = vmatpush.bf16.msra.mxu0 0
  %1072 = vmatpush.bf16.msra.mxu0 0
  %1073 = vmatpush.bf16.msra.mxu0 0
  %1074 = vmatpush.bf16.msra.mxu0 %v1065
  %1075 = vmatmul.bf16.gmra.mxu0 %v426
  %v1076 = vpop.f32.mrf.mxu0
  %v1077 = vadd.f32 %v397, %v1076
  %v1078 = vpop.f32.mrf.mxu0
  %v1079 = vadd.f32 %v402, %v1078
  %1080 = vmatmul.bf16.gmra.mxu0 %v429
  %v1081 = vpop.f32.mrf.mxu0
  %v1082 = vadd.f32 %v407, %v1081
  %v1083 = vpop.f32.mrf.mxu0
  %v1084 = vadd.f32 %v412, %v1083
  %1085 = vdwg.mxu0
  %v1086 = vmax.f32 %v1077, 0.0
  %v1087 = vmax.f32 %v1079, 0.0
  %v1088 = vmax.f32 %v1082, 0.0
  %v1089 = vmax.f32 %v1084, 0.0
  %v1090 = vpack.c.bf16 %v1087, %v1086
  %v1091 = vpack.c.bf16 %v1089, %v1088
  %v1093 = vsel %vm484, %v1090, 0
  %v1096 = vsel %vm484, %v1091, 0
  %1098 = vmatpush.bf16.msra.mxu0 0
  %1099 = vmatpush.bf16.msra.mxu0 0
  %1100 = vmatpush.bf16.msra.mxu0 0
  %1101 = vmatpush.bf16.msra.mxu0 0
  %1102 = vmatpush.bf16.msra.mxu0 %v479
  %1103 = vmatpush.bf16.msra.mxu0 %v478
  %1104 = vmatpush.bf16.msra.mxu0 %v477
  %1105 = vmatpush.bf16.msra.mxu0 %v476
  %1106 = vmatmul.bf16.gmra.mxu0 %v1093
  %v1107 = vpop.f32.mrf.mxu0
  %v1108 = vadd.f32 0.0, %v1107
  %v1109 = vpop.f32.mrf.mxu0
  %v1110 = vadd.f32 0.0, %v1109
  %1111 = vmatmul.bf16.gmra.mxu0 %v1096
  %v1112 = vpop.f32.mrf.mxu0
  %v1113 = vadd.f32 0.0, %v1112
  %v1114 = vpop.f32.mrf.mxu0
  %v1115 = vadd.f32 0.0, %v1114
  %1116 = vdwg.mxu0
  %v1117 = vpack.c.bf16 %v1110, %v1108
  %v1118 = vpack.c.bf16 %v1115, %v1113
  %1119 = vmatpush.bf16.msra.mxu0 0
  %1120 = vmatpush.bf16.msra.mxu0 0
  %1121 = vmatpush.bf16.msra.mxu0 0
  %1122 = vmatpush.bf16.msra.mxu0 0
  %1123 = vmatpush.bf16.msra.mxu0 0
  %1124 = vmatpush.bf16.msra.mxu0 0
  %1125 = vmatpush.bf16.msra.mxu0 %v1118
  %1126 = vmatpush.bf16.msra.mxu0 %v1117
  %1127 = vmatmul.bf16.gmra.mxu0 %v544
  %v1128 = vpop.f32.mrf.mxu0
  %v1129 = vadd.f32 %v515, %v1128
  %v1130 = vpop.f32.mrf.mxu0
  %v1131 = vadd.f32 %v520, %v1130
  %1132 = vmatmul.bf16.gmra.mxu0 %v547
  %v1133 = vpop.f32.mrf.mxu0
  %v1134 = vadd.f32 %v525, %v1133
  %v1135 = vpop.f32.mrf.mxu0
  %v1136 = vadd.f32 %v530, %v1135
  %1137 = vdwg.mxu0
  %v1138 = vmax.f32 %v1129, 0.0
  %v1139 = vmax.f32 %v1131, 0.0
  %v1140 = vmax.f32 %v1134, 0.0
  %v1141 = vmax.f32 %v1136, 0.0
  %v1142 = vpack.c.bf16 %v1139, %v1138
  %v1143 = vpack.c.bf16 %v1141, %v1140
  %1144 = vmatpush.bf16.msra.mxu0 0
  %1145 = vmatpush.bf16.msra.mxu0 0
  %1146 = vmatpush.bf16.msra.mxu0 0
  %1147 = vmatpush.bf16.msra.mxu0 0
  %1148 = vmatpush.bf16.msra.mxu0 0
  %1149 = vmatpush.bf16.msra.mxu0 0
  %1150 = vmatpush.bf16.msra.mxu0 %v1143
  %1151 = vmatpush.bf16.msra.mxu0 %v1142
  %1152 = vmatmul.bf16.gmra.mxu0 %v575
  %v1153 = vpop.f32.mrf.mxu0
  %v1154 = vadd.f32 0.0, %v1153
  %v1155 = vpop.f32.mrf.mxu0
  %1156 = vdwg.mxu0
  %v1157 = vmul.f32 %v1154, %v591
  %v1158 = vsel %vm484, %v1157, 0.0
  %1159 = vadd.xlane.f32.xlu0 %v1158
  %v1160 = vpop.xlane.xlu0 %1159
  %v1161 = vadd.f32 %v1160, %v130
  %s1162 = scalar_lea.vmem %s11, 8
  %1163 = vst.msk [vmem:[%s1162] sm:$0xff] %vm598, %v1161
  %v1164 = vmul.f32 %v1161, 1.442695
  %v1165 = vpow.pop %v1164
  %v1166 = vand.u32 2147483647, %v1161
  %vm1167 = vcmp.le.f32.partialorder %v1166, 0.7853982
  %vm1168 = vcmp.lt.s32.totalorder %v1161, 0
  %v1169 = vand.u32 %v1161, 2139095040
  %v1170 = vshrl.u32 %v1169, 23
  %v1171 = vsub.s32 %v1170, 127
  %v1172 = vand.u32 2147483647, %v1161
  %v1173 = vand.u32 %v1172, 8388607
  %v1174 = vor.u32 %v1173, 8388608
  %v1175 = vsub.s32 0, %v1174
  %v1176 = vadd.s32 %v1171, 1
  %vm1177 = vcmp.gt.s32.totalorder %v1176, 0
  %v1178 = vsel %vm1177, %v1176, 0
  %v1179 = vshrl.u32 %v1178, 5
  %v1180 = vand.u32 %v1178, 31
  %v1181 = vsub.s32 32, %v1180
  %v1182 = vshrl.u32 683565275, %v1181
  %v1183 = vshll.u32 683565275, %v1180
  %v1184 = vshrl.u32 2475754826, %v1181
  %v1185 = vor.u32 %v1183, %v1184
  %v1186 = vshll.u32 2475754826, %v1180
  %v1187 = vshrl.u32 2131351028, %v1181
  %v1188 = vor.u32 %v1186, %v1187
  %v1189 = vshll.u32 2131351028, %v1180
  %v1190 = vshrl.u32 2102212464, %v1181
  %v1191 = vor.u32 %v1189, %v1190
  %v1192 = vshll.u32 2102212464, %v1180
  %v1193 = vshrl.u32 920167782, %v1181
  %v1194 = vor.u32 %v1192, %v1193
  %v1195 = vshll.u32 920167782, %v1180
  %v1196 = vshrl.u32 1326507024, %v1181
  %v1197 = vor.u32 %v1195, %v1196
  %vm1198 = vcmp.lt.s32.totalorder %v1179, 1
  %vm1199 = vcmp.lt.s32.totalorder %v1179, 2
  %vm1200 = vcmp.lt.s32.totalorder %v1179, 3
  %vm1201 = vcmp.lt.s32.totalorder %v1179, 4
  %v1202 = vsel %vm1198, %v1182, %v1185
  %v1203 = vsel %vm1201, %v1191, 2102212464
  %v1204 = vsel %vm1200, %v1188, %v1203
  %v1205 = vsel %vm1199, %v1202, %v1204
  %v1206 = vsel %vm1198, %v1185, %v1188
  %v1207 = vsel %vm1201, %v1194, 920167782
  %v1208 = vsel %vm1200, %v1191, %v1207
  %v1209 = vsel %vm1199, %v1206, %v1208
  %v1210 = vsel %vm1198, %v1188, %v1191
  %v1211 = vsel %vm1201, %v1197, 1326507024
  %v1212 = vsel %vm1200, %v1194, %v1211
  %v1213 = vsel %vm1199, %v1210, %v1212
  %v1214 = vshll.u32 %v1174, 8
  %v1215 = vand.u32 %v1214, 65535
  %v1216 = vshrl.u32 %v1214, 16
  %v1217 = vand.u32 %v1213, 65535
  %v1218 = vshrl.u32 %v1213, 16
  %v1219 = vmul.u32 %v1215, %v1217
  %v1220 = vmul.u32 %v1215, %v1218
  %v1221 = vmul.u32 %v1216, %v1217
  %v1222 = vmul.u32 %v1216, %v1218
  %v1223 = vshll.u32 %v1220, 16
  %v1224 = vshrl.u32 %v1220, 16
  %v1225 = vshll.u32 %v1221, 16
  %v1226 = vshrl.u32 %v1221, 16
  %vm1227 = vc.u32 %v1219, %v1223
  %v1228 = vsel %vm1227, 1, 0
  %v1229 = vadd.s32 %v1219, %v1223
  %v1230 = vadd.s32 %v1222, %v1228
  %vm1231 = vc.u32 %v1229, %v1225
  %v1232 = vsel %vm1231, 1, 0
  %v1233 = vadd.s32 %v1229, %v1225
  %v1234 = vadd.s32 %v1230, %v1232
  %v1235 = vadd.s32 %v1234, %v1224
  %v1236 = vadd.s32 %v1235, %v1226
  %v1237 = vand.u32 %v1214, 65535
  %v1238 = vshrl.u32 %v1214, 16
  %v1239 = vand.u32 %v1209, 65535
  %v1240 = vshrl.u32 %v1209, 16
  %v1241 = vmul.u32 %v1237, %v1239
  %v1242 = vmul.u32 %v1237, %v1240
  %v1243 = vmul.u32 %v1238, %v1239
  %v1244 = vmul.u32 %v1238, %v1240
  %v1245 = vshll.u32 %v1242, 16
  %v1246 = vshrl.u32 %v1242, 16
  %v1247 = vshll.u32 %v1243, 16
  %v1248 = vshrl.u32 %v1243, 16
  %vm1249 = vc.u32 %v1241, %v1245
  %v1250 = vsel %vm1249, 1, 0
  %v1251 = vadd.s32 %v1241, %v1245
  %v1252 = vadd.s32 %v1244, %v1250
  %vm1253 = vc.u32 %v1251, %v1247
  %v1254 = vsel %vm1253, 1, 0
  %v1255 = vadd.s32 %v1251, %v1247
  %v1256 = vadd.s32 %v1252, %v1254
  %v1257 = vadd.s32 %v1256, %v1246
  %v1258 = vadd.s32 %v1257, %v1248
  %v1259 = vmul.u32 %v1214, %v1205
  %v1260 = vadd.s32 %v1236, %v1255
  %vm1261 = vc.u32 %v1236, %v1255
  %v1262 = vadd.s32 %v1258, 1
  %v1263 = vsel %vm1261, %v1262, %v1258
  %v1264 = vadd.s32 %v1259, %v1263
  %v1265 = vadd.s32 %v1264, 536870912
  %v1266 = vshrl.u32 %v1265, 30
  %v1267 = vshll.u32 %v1266, 30
  %v1268 = vsub.s32 %v1264, %v1267
  %vm1269 = vcmp.lt.s32.totalorder %v1268, 0
  %v1270 = vsub.s32 0, %v1268
  %v1271 = vsel %vm1269, %v1270, %v1268
  %v1272 = vclz %v1271
  %v1273 = vsub.s32 %v1272, 2
  %vm1274 = vcmp.gt.s32.totalorder 0, %v1273
  %v1275 = vsel %vm1274, 0, %v1273
  %v1276 = vsub.s32 32, %v1275
  %v1277 = vshll.u32 %v1268, %v1275
  %v1278 = vshrl.u32 %v1260, %v1276
  %v1279 = vor.u32 %v1277, %v1278
  %v1280 = vsub.s32 4294967266, %v1275
  %v1281 = vadd.s32 %v1280, 127
  %v1282 = vshll.u32 %v1281, 23
  %v1283 = vor.u32 4788187, %v1282
  %v1284 = vand.u32 2147483647, %v1283
  %v1286 = vcvt.s32.f32 %v1279
  %v1287 = vmul.f32 %v1286, %v1284
  %v1288 = vxor.u32 %v1287, 2147483648
  %v1289 = vsel %vm1168, %v1288, %v1287
  %v1290 = vsub.s32 4, %v1266
  %v1291 = vsel %vm1168, %v1290, %v1266
  %v1292 = vsel %vm1167, %v1161, %v1289
  %v1293 = vsel %vm1167, 0, %v1291
  %v1294 = vmul.f32 %v1292, %v1292
  %v1295 = vmul.f32 %v1294, -0.001358992
  %v1296 = vadd.f32 %v1295, 0.041655596
  %v1297 = vmul.f32 %v1294, %v1296
  %v1298 = vadd.f32 %v1297, -0.4999988
  %v1299 = vmul.f32 %v1294, %v1298
  %v1300 = vadd.f32 1.0, %v1299
  %v1301 = vmul.f32 %v1292, %v1292
  %v1302 = vmul.f32 %v1301, -0.00019511016
  %v1303 = vadd.f32 %v1302, 0.008332121
  %v1304 = vmul.f32 %v1301, %v1303
  %v1305 = vadd.f32 %v1304, -0.16666654
  %v1306 = vmul.f32 %v1301, %v1305
  %v1307 = vadd.f32 %v1306, 1.0
  %v1308 = vmul.f32 %v1307, %v1292
  %vm1309 = vweird.f32 %v1161
  %v1310 = vand.u32 %v1293, 3
  %vm1311 = vcmp.lt.s32.totalorder %v1310, 2
  %vm1312 = vcmp.eq.s32.totalorder %v1310, 0
  %v1313 = vxor.u32 %v1308, 2147483648
  %v1314 = vsel %vm1312, %v1300, %v1313
  %vm1315 = vcmp.eq.s32.totalorder %v1310, 2
  %v1316 = vxor.u32 %v1300, 2147483648
  %v1317 = vsel %vm1315, %v1316, %v1308
  %v1318 = vsel %vm1311, %v1314, %v1317
  %v1319 = vsel %vm1309, nan, %v1318
  %v1320 = vand.u32 2147483647, %v1161
  %vm1321 = vcmp.le.f32.partialorder %v1320, 0.7853982
  %vm1322 = vcmp.lt.s32.totalorder %v1161, 0
  %v1323 = vand.u32 %v1161, 2139095040
  %v1324 = vshrl.u32 %v1323, 23
  %v1325 = vsub.s32 %v1324, 127
  %v1326 = vand.u32 2147483647, %v1161
  %v1327 = vand.u32 %v1326, 8388607
  %v1328 = vor.u32 %v1327, 8388608
  %v1329 = vsub.s32 0, %v1328
  %v1330 = vadd.s32 %v1325, 1
  %vm1331 = vcmp.gt.s32.totalorder %v1330, 0
  %v1332 = vsel %vm1331, %v1330, 0
  %v1333 = vshrl.u32 %v1332, 5
  %v1334 = vand.u32 %v1332, 31
  %v1335 = vsub.s32 32, %v1334
  %v1336 = vshrl.u32 683565275, %v1335
  %v1337 = vshll.u32 683565275, %v1334
  %v1338 = vshrl.u32 2475754826, %v1335
  %v1339 = vor.u32 %v1337, %v1338
  %v1340 = vshll.u32 2475754826, %v1334
  %v1341 = vshrl.u32 2131351028, %v1335
  %v1342 = vor.u32 %v1340, %v1341
  %v1343 = vshll.u32 2131351028, %v1334
  %v1344 = vshrl.u32 2102212464, %v1335
  %v1345 = vor.u32 %v1343, %v1344
  %v1346 = vshll.u32 2102212464, %v1334
  %v1347 = vshrl.u32 920167782, %v1335
  %v1348 = vor.u32 %v1346, %v1347
  %v1349 = vshll.u32 920167782, %v1334
  %v1350 = vshrl.u32 1326507024, %v1335
  %v1351 = vor.u32 %v1349, %v1350
  %vm1352 = vcmp.lt.s32.totalorder %v1333, 1
  %vm1353 = vcmp.lt.s32.totalorder %v1333, 2
  %vm1354 = vcmp.lt.s32.totalorder %v1333, 3
  %vm1355 = vcmp.lt.s32.totalorder %v1333, 4
  %v1356 = vsel %vm1352, %v1336, %v1339
  %v1357 = vsel %vm1355, %v1345, 2102212464
  %v1358 = vsel %vm1354, %v1342, %v1357
  %v1359 = vsel %vm1353, %v1356, %v1358
  %v1360 = vsel %vm1352, %v1339, %v1342
  %v1361 = vsel %vm1355, %v1348, 920167782
  %v1362 = vsel %vm1354, %v1345, %v1361
  %v1363 = vsel %vm1353, %v1360, %v1362
  %v1364 = vsel %vm1352, %v1342, %v1345
  %v1365 = vsel %vm1355, %v1351, 1326507024
  %v1366 = vsel %vm1354, %v1348, %v1365
  %v1367 = vsel %vm1353, %v1364, %v1366
  %v1368 = vshll.u32 %v1328, 8
  %v1369 = vand.u32 %v1368, 65535
  %v1370 = vshrl.u32 %v1368, 16
  %v1371 = vand.u32 %v1367, 65535
  %v1372 = vshrl.u32 %v1367, 16
  %v1373 = vmul.u32 %v1369, %v1371
  %v1374 = vmul.u32 %v1369, %v1372
  %v1375 = vmul.u32 %v1370, %v1371
  %v1376 = vmul.u32 %v1370, %v1372
  %v1377 = vshll.u32 %v1374, 16
  %v1378 = vshrl.u32 %v1374, 16
  %v1379 = vshll.u32 %v1375, 16
  %v1380 = vshrl.u32 %v1375, 16
  %vm1381 = vc.u32 %v1373, %v1377
  %v1382 = vsel %vm1381, 1, 0
  %v1383 = vadd.s32 %v1373, %v1377
  %v1384 = vadd.s32 %v1376, %v1382
  %vm1385 = vc.u32 %v1383, %v1379
  %v1386 = vsel %vm1385, 1, 0
  %v1387 = vadd.s32 %v1383, %v1379
  %v1388 = vadd.s32 %v1384, %v1386
  %v1389 = vadd.s32 %v1388, %v1378
  %v1390 = vadd.s32 %v1389, %v1380
  %v1391 = vand.u32 %v1368, 65535
  %v1392 = vshrl.u32 %v1368, 16
  %v1393 = vand.u32 %v1363, 65535
  %v1394 = vshrl.u32 %v1363, 16
  %v1395 = vmul.u32 %v1391, %v1393
  %v1396 = vmul.u32 %v1391, %v1394
  %v1397 = vmul.u32 %v1392, %v1393
  %v1398 = vmul.u32 %v1392, %v1394
  %v1399 = vshll.u32 %v1396, 16
  %v1400 = vshrl.u32 %v1396, 16
  %v1401 = vshll.u32 %v1397, 16
  %v1402 = vshrl.u32 %v1397, 16
  %vm1403 = vc.u32 %v1395, %v1399
  %v1404 = vsel %vm1403, 1, 0
  %v1405 = vadd.s32 %v1395, %v1399
  %v1406 = vadd.s32 %v1398, %v1404
  %vm1407 = vc.u32 %v1405, %v1401
  %v1408 = vsel %vm1407, 1, 0
  %v1409 = vadd.s32 %v1405, %v1401
  %v1410 = vadd.s32 %v1406, %v1408
  %v1411 = vadd.s32 %v1410, %v1400
  %v1412 = vadd.s32 %v1411, %v1402
  %v1413 = vmul.u32 %v1368, %v1359
  %v1414 = vadd.s32 %v1390, %v1409
  %vm1415 = vc.u32 %v1390, %v1409
  %v1416 = vadd.s32 %v1412, 1
  %v1417 = vsel %vm1415, %v1416, %v1412
  %v1418 = vadd.s32 %v1413, %v1417
  %v1419 = vadd.s32 %v1418, 536870912
  %v1420 = vshrl.u32 %v1419, 30
  %v1421 = vshll.u32 %v1420, 30
  %v1422 = vsub.s32 %v1418, %v1421
  %vm1423 = vcmp.lt.s32.totalorder %v1422, 0
  %v1424 = vsub.s32 0, %v1422
  %v1425 = vsel %vm1423, %v1424, %v1422
  %v1426 = vclz %v1425
  %v1427 = vsub.s32 %v1426, 2
  %vm1428 = vcmp.gt.s32.totalorder 0, %v1427
  %v1429 = vsel %vm1428, 0, %v1427
  %v1430 = vsub.s32 32, %v1429
  %v1431 = vshll.u32 %v1422, %v1429
  %v1432 = vshrl.u32 %v1414, %v1430
  %v1433 = vor.u32 %v1431, %v1432
  %v1434 = vsub.s32 4294967266, %v1429
  %v1435 = vadd.s32 %v1434, 127
  %v1436 = vshll.u32 %v1435, 23
  %v1437 = vor.u32 4788187, %v1436
  %v1438 = vand.u32 2147483647, %v1437
  %v1440 = vcvt.s32.f32 %v1433
  %v1441 = vmul.f32 %v1440, %v1438
  %v1442 = vxor.u32 %v1441, 2147483648
  %v1443 = vsel %vm1322, %v1442, %v1441
  %v1444 = vsub.s32 4, %v1420
  %v1445 = vsel %vm1322, %v1444, %v1420
  %v1446 = vsel %vm1321, %v1161, %v1443
  %v1447 = vsel %vm1321, 0, %v1445
  %v1448 = vmul.f32 %v1446, %v1446
  %v1449 = vmul.f32 %v1448, -0.001358992
  %v1450 = vadd.f32 %v1449, 0.041655596
  %v1451 = vmul.f32 %v1448, %v1450
  %v1452 = vadd.f32 %v1451, -0.4999988
  %v1453 = vmul.f32 %v1448, %v1452
  %v1454 = vadd.f32 1.0, %v1453
  %v1455 = vmul.f32 %v1446, %v1446
  %v1456 = vmul.f32 %v1455, -0.00019511016
  %v1457 = vadd.f32 %v1456, 0.008332121
  %v1458 = vmul.f32 %v1455, %v1457
  %v1459 = vadd.f32 %v1458, -0.16666654
  %v1460 = vmul.f32 %v1455, %v1459
  %v1461 = vadd.f32 %v1460, 1.0
  %v1462 = vmul.f32 %v1461, %v1446
  %vm1463 = vweird.f32 %v1161
  %v1464 = vadd.s32 %v1447, 3
  %v1465 = vand.u32 %v1464, 3
  %vm1466 = vcmp.lt.s32.totalorder %v1465, 2
  %vm1467 = vcmp.eq.s32.totalorder %v1465, 0
  %v1468 = vxor.u32 %v1462, 2147483648
  %v1469 = vsel %vm1467, %v1454, %v1468
  %vm1470 = vcmp.eq.s32.totalorder %v1465, 2
  %v1471 = vxor.u32 %v1454, 2147483648
  %v1472 = vsel %vm1470, %v1471, %v1462
  %v1473 = vsel %vm1466, %v1469, %v1472
  %v1474 = vsel %vm1463, nan, %v1473
  %1476 = vset.pattern.permute.xlu0 0
  %1477 = vperm.xlu0 %1476, %v1319
  %v1478 = vpop.permute.xlu0 %1477
  %v1480 = vmul.f32 %v1478, %v917
  %1482 = vset.pattern.permute.xlu0 0
  %1483 = vperm.xlu0 %1482, %v1474
  %v1484 = vpop.permute.xlu0 %1483
  %v1486 = vmul.f32 %v1484, %v925
  %v1487 = vsub.f32 %v1480, %v1486
  %v1488 = vmul.f32 %v1484, %v917
  %v1489 = vmul.f32 %v1478, %v925
  %v1490 = vadd.f32 %v1488, %v1489
  %v1491 = vmul.f32 %v1478, %v932
  %v1493 = vrot.slane %v1490, 7
  %v1495 = vmul.f32 %v1484, %v1493
  %v1496 = vadd.f32 %v1491, %v1495
  %v1497 = vsub.f32 0.0, %v1474
  %1499 = vset.pattern.permute.xlu0 0
  %1500 = vperm.xlu0 %1499, %v1497
  %v1501 = vpop.permute.xlu0 %1500
  %v1503 = vmul.f32 %v1501, %v932
  %v1504 = vmul.f32 %v1478, %v1493
  %v1505 = vadd.f32 %v1503, %v1504
  %v1507 = vrot.slane %v1496, 7
  %v1509 = vmul.f32 %v1478, %v1507
  %v1511 = vrot.slane %v1487, 6
  %v1513 = vmul.f32 %v1484, %v1511
  %v1514 = vsub.f32 %v1509, %v1513
  %v1515 = vmul.f32 %v1484, %v1507
  %v1516 = vmul.f32 %v1478, %v1511
  %v1517 = vadd.f32 %v1515, %v1516
  %1519 = vset.pattern.permute.xlu0 0
  %1520 = vperm.xlu0 %1519, %v1165
  %v1521 = vpop.permute.xlu0 %1520
  %v1524 = vrot.slane %v1514, 7
  %v1526 = vmul.f32 %v1521, %v1524
  %1528 = vset.pattern.permute.xlu0 0
  %1529 = vperm.xlu0 %1528, %v1161
  %v1530 = vpop.permute.xlu0 %1529
  %v1531 = vrot.slane %v1530, 2
  %v1533 = vadd.f32 %v1526, %v1531
  %s1534 = scalar_lea.vmem %s12, 4
  %1535 = vst [vmem:[%s1534 - $0x6] sm:$0x40] %v1533
  %v1537 = vrot.slane %v1517, 7
  %v1539 = vmul.f32 %v1521, %v1537
  %v1540 = vrot.slane %v1530, 3
  %v1542 = vadd.f32 %v1539, %v1540
  %1543 = vst [vmem:[%s1534 - $0x5] sm:$0x40] %v1542
  %v1545 = vrot.slane %v1505, 6
  %v1547 = vmul.f32 %v1521, %v1545
  %v1548 = vrot.slane %v1530, 4
  %v1550 = vadd.f32 %v1547, %v1548
  %1551 = vst [vmem:[%s1534 - $0x4] sm:$0x40] %v1550
  // Predicated region
  $region46: #{tpu_custom_call.1} parent=0 // pred_check
    _
  $region47: #{tpu_custom_call.1} parent=0 // pred_check_branch
    %1553 = sbr.rel (0) target = $region49
  $region48: #{tpu_custom_call.1} parent=0 // pred_region
    _
  $region49: #{tpu_custom_call.1} parent=0 // pred_fallthru
    _
  // Predicated region
  $region50: #{tpu_custom_call.1} parent=0 // pred_check
    _
  $region51: #{tpu_custom_call.1} parent=0 // pred_check_branch
    %1555 = sbr.rel (0) target = $region53
  $region52: #{tpu_custom_call.1} parent=0 // pred_region
    _
  $region53: #{tpu_custom_call.1} parent=0 // pred_fallthru
    _
  // Predicated region
  $region54: #{tpu_custom_call.1} parent=0 // pred_check
    _
  $region55: #{tpu_custom_call.1} parent=0 // pred_check_branch
    %1557 = sbr.rel (0) target = $region57
  $region56: #{tpu_custom_call.1} parent=0 // pred_region
    _
  $region57: #{tpu_custom_call.1} parent=0 // pred_fallthru
    _
  // Predicated region
  $region58: #{tpu_custom_call.1} parent=0 // pred_check
    _
  $region59: #{tpu_custom_call.1} parent=0 // pred_check_branch
    %1559 = sbr.rel (0) target = $region61
  $region60: #{tpu_custom_call.1} parent=0 // pred_region
    _
  $region61: #{tpu_custom_call.1} parent=0 // pred_fallthru
    _

</llo_original>
